<compile_context>
chip_gen: v6e
topology: v6e:2x2x1
jax: 0.10.0
libtpu: 0.0.40
codegen_flags: <defaults>
</compile_context>

<pallas_src>
import functools

import jax
import jax.numpy as jnp
import numpy as np
from jax import lax
from jax.experimental import pallas as pl
from jax.experimental.pallas import tpu as pltpu

# TODO(synk): `FeatureFusion` is not defined in the reference source; it is
# assumed here to be: FeatureFusion(a, b) = ReLU(Conv2d(2C -> C, k=1)(cat([a, b], dim=1))).

LN_EPS = 1e-5


# ---------------------------------------------------------------------------
# Single fused kernel (was 4 pallas_calls):
#   (left fusion | right fusion) -> final fusion -> 3x3 conv (pad=1)
#   -> LayerNorm([C, H, W])
# One grid step per sample; every intermediate stays in VMEM/vregs, so the
# tiny (HW, C) intermediates never round-trip through HBM and 3 kernel-launch
# overheads are eliminated.
# ---------------------------------------------------------------------------
def _encoder_kernel(s_ref, y_ref, r_ref,
                    w1s_ref, w1y_ref, w1r_ref, b1_ref,
                    w2_ref, b2_ref,
                    w9_ref, bc_ref, g_ref, bt_ref,
                    o_ref, pad_ref, *, H, W):
    HW, C = g_ref.shape
    s = s_ref[0]                                    # (HW, C)
    y = y_ref[0]
    r = r_ref[0]

    # --- Stage 1: left & right 1x1 fusions with merged (stacked) weights so
    # `s` is multiplied exactly once and the intermediate is 2C (=64) wide.
    # Columns [0:C] of f12 = fused1, columns [C:2C] = fused2.
    pre12 = jnp.dot(s, w1s_ref[...], preferred_element_type=jnp.float32)
    pre12 = pre12 + jnp.dot(y, w1y_ref[...], preferred_element_type=jnp.float32)
    pre12 = pre12 + jnp.dot(r, w1r_ref[...], preferred_element_type=jnp.float32)
    f12 = jnp.maximum(pre12 + b1_ref[...], 0.0)     # (HW, 2C)

    # --- Stage 2: final 1x1 fusion directly on the (fused1|fused2) slab
    # (the channel-concat is implicit in the stacked weight layout).
    fused = jnp.maximum(
        jnp.dot(f12, w2_ref[...], preferred_element_type=jnp.float32)
        + b2_ref[...], 0.0)                         # (HW, C)

    # --- Stage 3: 3x3 conv, padding=1.  Zero-pad into a VMEM scratch (no
    # wrapper-side jnp.pad -> no extra HBM round-trip of the activation),
    # then accumulate the 9 shifted-window matmuls on the MXU.
    pad_ref[...] = jnp.zeros_like(pad_ref)
    pad_ref[1:H + 1, 1:W + 1, :] = fused.reshape(H, W, C)
    acc = jnp.zeros((HW, C), jnp.float32)
    for kh in range(3):
        for kw in range(3):
            patch = pad_ref[kh:kh + H, kw:kw + W, :].reshape(HW, C)
            acc = acc + jnp.dot(patch, w9_ref[kh * 3 + kw],
                                preferred_element_type=jnp.float32)
    acc = acc + bc_ref[...]

    # --- Stage 4: LayerNorm over the whole (C, H, W) sample (biased variance,
    # torch semantics); the centered value is reused for the normalize step.
    mean = jnp.mean(acc)
    centered = acc - mean
    var = jnp.mean(centered * centered)
    yn = centered * lax.rsqrt(var + LN_EPS)
    o_ref[...] = ((yn * g_ref[...] + bt_ref[...]).astype(o_ref.dtype))[None]


# ---------------------------------------------------------------------------
# Parameter preparation (done once, outside the per-forward path): transposes
# / merges / reshapes of weights so the forward only touches activations.
# ---------------------------------------------------------------------------
def prepare_encoder_params(p):
    C = p["b_l"].shape[0]
    H, W = p["gamma"].shape[1], p["gamma"].shape[2]
    zero = jnp.zeros((C, C), jnp.float32)
    # 1x1 fusion weights transposed for pixel-major matmuls, with the left
    # and right branches stacked so each input participates in one matmul.
    w1s = jnp.concatenate([p["w_l"][:, :C].T, p["w_r"][:, :C].T], axis=1)  # (C, 2C)
    w1y = jnp.concatenate([p["w_l"][:, C:].T, zero], axis=1)               # (C, 2C)
    w1r = jnp.concatenate([zero, p["w_r"][:, C:].T], axis=1)               # (C, 2C)
    b1 = jnp.concatenate([p["b_l"], p["b_r"]]).reshape(1, 2 * C)
    w2 = p["w_f"].T                                                        # (2C, C)
    b2 = p["b_f"].reshape(1, C)
    # 3x3 conv weight (C_out, C_in, 3, 3) -> (9, C_in, C_out), tap = kh*3+kw.
    w9 = jnp.transpose(p["w_conv"], (2, 3, 1, 0)).reshape(9, C, C)
    bc = p["b_conv"].reshape(1, C)
    g = jnp.transpose(p["gamma"], (1, 2, 0)).reshape(H * W, C)
    bt = jnp.transpose(p["beta"], (1, 2, 0)).reshape(H * W, C)
    return dict(w1s=w1s, w1y=w1y, w1r=w1r, b1=b1, w2=w2, b2=b2,
                w9=w9, bc=bc, g=g, bt=bt)


# ---------------------------------------------------------------------------
# EncoderModule forward (single Pallas call) + pure-JAX reference
# ---------------------------------------------------------------------------
@jax.jit
def encoder_forward_pallas(swin, yolo, rcnn, kp):
    N, C, H, W = swin.shape
    HW = H * W
    to_pix = lambda x: jnp.transpose(x, (0, 2, 3, 1)).reshape(N, HW, C)
    s, y, r = to_pix(swin), to_pix(yolo), to_pix(rcnn)

    kernel = functools.partial(_encoder_kernel, H=H, W=W)

    # Advisory cost hint for XLA scheduling around the custom call.
    flops = N * 2 * HW * C * (17 * C)          # 3 fusion matmuls + final + 9 conv taps
    param_bytes = 4 * (3 * C * 2 * C + 2 * C + 2 * C * C + C
                       + 9 * C * C + C + 2 * HW * C)
    bytes_accessed = 4 * (3 * N * HW * C + N * HW * C) + param_bytes

    out = pl.pallas_call(
        kernel,
        grid=(N,),
        in_specs=[
            pl.BlockSpec((1, HW, C), lambda n: (n, 0, 0)),      # swin pixels
            pl.BlockSpec((1, HW, C), lambda n: (n, 0, 0)),      # yolo pixels
            pl.BlockSpec((1, HW, C), lambda n: (n, 0, 0)),      # rcnn pixels
            pl.BlockSpec((C, 2 * C), lambda n: (0, 0)),         # w1s
            pl.BlockSpec((C, 2 * C), lambda n: (0, 0)),         # w1y
            pl.BlockSpec((C, 2 * C), lambda n: (0, 0)),         # w1r
            pl.BlockSpec((1, 2 * C), lambda n: (0, 0)),         # b1
            pl.BlockSpec((2 * C, C), lambda n: (0, 0)),         # w2
            pl.BlockSpec((1, C), lambda n: (0, 0)),             # b2
            pl.BlockSpec((9, C, C), lambda n: (0, 0, 0)),       # conv taps
            pl.BlockSpec((1, C), lambda n: (0, 0)),             # conv bias
            pl.BlockSpec((HW, C), lambda n: (0, 0)),            # LN gamma
            pl.BlockSpec((HW, C), lambda n: (0, 0)),            # LN beta
        ],
        out_specs=pl.BlockSpec((1, HW, C), lambda n: (n, 0, 0)),
        out_shape=jax.ShapeDtypeStruct((N, HW, C), jnp.float32),
        scratch_shapes=[pltpu.VMEM((H + 2, W + 2, C), jnp.float32)],
        compiler_params=pltpu.CompilerParams(
            dimension_semantics=("parallel",)),                 # v7x: 2 TCs over N
        cost_estimate=pl.CostEstimate(flops=flops, transcendentals=N,
                                      bytes_accessed=bytes_accessed),
    )(s, y, r, kp["w1s"], kp["w1y"], kp["w1r"], kp["b1"],
      kp["w2"], kp["b2"], kp["w9"], kp["bc"], kp["g"], kp["bt"])

    # (N, HW, C) -> NCHW (contiguous reshape + one transpose).
    return jnp.transpose(out.reshape(N, H, W, C), (0, 3, 1, 2))


def encoder_forward_ref(swin, yolo, rcnn, p):
    def ff(a, b, w, bias):
        x = jnp.concatenate([a, b], axis=1)
        yy = lax.conv_general_dilated(
            x, w[:, :, None, None], (1, 1), "VALID",
            dimension_numbers=("NCHW", "OIHW", "NCHW"))
        return jax.nn.relu(yy + bias[None, :, None, None])

    f1 = ff(swin, yolo, p["w_l"], p["b_l"])
    f2 = ff(swin, rcnn, p["w_r"], p["b_r"])
    f = ff(f1, f2, p["w_f"], p["b_f"])
    y = lax.conv_general_dilated(
        f, p["w_conv"], (1, 1), ((1, 1), (1, 1)),
        dimension_numbers=("NCHW", "OIHW", "NCHW")) + p["b_conv"][None, :, None, None]
    mean = jnp.mean(y, axis=(1, 2, 3), keepdims=True)
    var = jnp.mean((y - mean) ** 2, axis=(1, 2, 3), keepdims=True)
    yn = (y - mean) / jnp.sqrt(var + LN_EPS)
    return yn * p["gamma"][None] + p["beta"][None]


if __name__ == "__main__":
    # Small shapes consistent with the module: target_channels=32, target_size=(8, 8)
    N, C, H, W = 2, 32, 8, 8
    f32 = jnp.float32
    key = jax.random.PRNGKey(0)
    ks = jax.random.split(key, 12)

    feature_swin = jax.random.normal(ks[0], (N, C, H, W), f32)
    feature_yolo = jax.random.normal(ks[1], (N, C, H, W), f32)
    feature_rcnn = jax.random.normal(ks[2], (N, C, H, W), f32)

    def ff_params(k):
        kw, kb = jax.random.split(k)
        w = jax.random.normal(kw, (C, 2 * C), f32) / jnp.sqrt(2.0 * C)
        b = 0.1 * jax.random.normal(kb, (C,), f32)
        return w, b

    w_l, b_l = ff_params(ks[3])
    w_r, b_r = ff_params(ks[4])
    w_f, b_f = ff_params(ks[5])
    params = dict(
        w_l=w_l, b_l=b_l, w_r=w_r, b_r=b_r, w_f=w_f, b_f=b_f,
        w_conv=jax.random.normal(ks[6], (C, C, 3, 3), f32) / jnp.sqrt(9.0 * C),
        b_conv=0.1 * jax.random.normal(ks[7], (C,), f32),
        gamma=1.0 + 0.1 * jax.random.normal(ks[8], (C, H, W), f32),
        beta=0.1 * jax.random.normal(ks[9], (C, H, W), f32),
    )

    # Kernel-ready parameters: computed once, outside the per-forward path.
    kparams = prepare_encoder_params(params)

    out = encoder_forward_pallas(feature_swin, feature_yolo, feature_rcnn, kparams)
    out = jax.block_until_ready(out)
    assert out.shape == (N, C, H, W) and out.dtype == jnp.float32

    ref = encoder_forward_ref(feature_swin, feature_yolo, feature_rcnn, params)
    np.testing.assert_allclose(np.asarray(out), np.asarray(ref), rtol=1e-2, atol=2e-2)

    print("KERNEL_OK")
</pallas_src>

<mosaic_0001>
module attributes {stable_mosaic.version = 11 : i64} {
  func.func @_encoder_kernel(%arg0: i32, %arg1: memref<1x64x32xf32, #tpu.memory_space<vmem>>, %arg2: memref<1x64x32xf32, #tpu.memory_space<vmem>>, %arg3: memref<1x64x32xf32, #tpu.memory_space<vmem>>, %arg4: memref<32x64xf32, #tpu.memory_space<vmem>>, %arg5: memref<32x64xf32, #tpu.memory_space<vmem>>, %arg6: memref<32x64xf32, #tpu.memory_space<vmem>>, %arg7: memref<1x64xf32, #tpu.memory_space<vmem>>, %arg8: memref<64x32xf32, #tpu.memory_space<vmem>>, %arg9: memref<1x32xf32, #tpu.memory_space<vmem>>, %arg10: memref<9x32x32xf32, #tpu.memory_space<vmem>>, %arg11: memref<1x32xf32, #tpu.memory_space<vmem>>, %arg12: memref<64x32xf32, #tpu.memory_space<vmem>>, %arg13: memref<64x32xf32, #tpu.memory_space<vmem>>, %arg14: memref<1x64x32xf32, #tpu.memory_space<vmem>>, %arg15: memref<10x10x32xf32, #tpu.memory_space<vmem>>) attributes {dimension_semantics = [#tpu.dimension_semantics<parallel>], iteration_bounds = array<i64: 2>, scalar_prefetch = 0 : i64, scratch_operands = 1 : i64, tpu.core_type = #tpu.core_type<tc>, window_params = [{transform_indices = @transform_0, window_bounds = array<i64: 1, 64, 32>}, {transform_indices = @transform_1, window_bounds = array<i64: 1, 64, 32>}, {transform_indices = @transform_2, window_bounds = array<i64: 1, 64, 32>}, {pipeline_mode = #tpu.pipeline_mode<synchronous>, transform_indices = @transform_3, window_bounds = array<i64: 32, 64>}, {pipeline_mode = #tpu.pipeline_mode<synchronous>, transform_indices = @transform_4, window_bounds = array<i64: 32, 64>}, {pipeline_mode = #tpu.pipeline_mode<synchronous>, transform_indices = @transform_5, window_bounds = array<i64: 32, 64>}, {pipeline_mode = #tpu.pipeline_mode<synchronous>, transform_indices = @transform_6, window_bounds = array<i64: 1, 64>}, {pipeline_mode = #tpu.pipeline_mode<synchronous>, transform_indices = @transform_7, window_bounds = array<i64: 64, 32>}, {pipeline_mode = #tpu.pipeline_mode<synchronous>, transform_indices = @transform_8, window_bounds = array<i64: 1, 32>}, {pipeline_mode = #tpu.pipeline_mode<synchronous>, transform_indices = @transform_9, window_bounds = array<i64: 9, 32, 32>}, {pipeline_mode = #tpu.pipeline_mode<synchronous>, transform_indices = @transform_10, window_bounds = array<i64: 1, 32>}, {pipeline_mode = #tpu.pipeline_mode<synchronous>, transform_indices = @transform_11, window_bounds = array<i64: 64, 32>}, {pipeline_mode = #tpu.pipeline_mode<synchronous>, transform_indices = @transform_12, window_bounds = array<i64: 64, 32>}, {transform_indices = @transform_13, window_bounds = array<i64: 1, 64, 32>}]} {
    %c0 = arith.constant 0 : index
    %c0_0 = arith.constant 0 : index
    %c0_1 = arith.constant 0 : index
    %0 = vector.load %arg1[%c0, %c0_0, %c0_1] : memref<1x64x32xf32, #tpu.memory_space<vmem>>, vector<1x64x32xf32>
    %1 = vector.shape_cast %0 : vector<1x64x32xf32> to vector<64x32xf32>
    %c0_2 = arith.constant 0 : index
    %c0_3 = arith.constant 0 : index
    %c0_4 = arith.constant 0 : index
    %2 = vector.load %arg2[%c0_2, %c0_3, %c0_4] : memref<1x64x32xf32, #tpu.memory_space<vmem>>, vector<1x64x32xf32>
    %3 = vector.shape_cast %2 : vector<1x64x32xf32> to vector<64x32xf32>
    %c0_5 = arith.constant 0 : index
    %c0_6 = arith.constant 0 : index
    %c0_7 = arith.constant 0 : index
    %4 = vector.load %arg3[%c0_5, %c0_6, %c0_7] : memref<1x64x32xf32, #tpu.memory_space<vmem>>, vector<1x64x32xf32>
    %5 = vector.shape_cast %4 : vector<1x64x32xf32> to vector<64x32xf32>
    %c0_8 = arith.constant 0 : index
    %c0_9 = arith.constant 0 : index
    %6 = vector.load %arg4[%c0_8, %c0_9] : memref<32x64xf32, #tpu.memory_space<vmem>>, vector<32x64xf32>
    %cst = arith.constant dense<0.000000e+00> : vector<64x64xf32>
    %7 = tpu.matmul %1, %6, %cst {dimension_numbers = #tpu.dot_dimension_numbers<[1], [0], [0], [1], [0, 0, 1, 1], [], []>} : vector<64x32xf32>, vector<32x64xf32>, vector<64x64xf32> -> vector<64x64xf32>
    %c0_10 = arith.constant 0 : index
    %c0_11 = arith.constant 0 : index
    %8 = vector.load %arg5[%c0_10, %c0_11] : memref<32x64xf32, #tpu.memory_space<vmem>>, vector<32x64xf32>
    %cst_12 = arith.constant dense<0.000000e+00> : vector<64x64xf32>
    %9 = tpu.matmul %3, %8, %cst_12 {dimension_numbers = #tpu.dot_dimension_numbers<[1], [0], [0], [1], [0, 0, 1, 1], [], []>} : vector<64x32xf32>, vector<32x64xf32>, vector<64x64xf32> -> vector<64x64xf32>
    %10 = arith.addf %7, %9 : vector<64x64xf32>
    %c0_13 = arith.constant 0 : index
    %c0_14 = arith.constant 0 : index
    %11 = vector.load %arg6[%c0_13, %c0_14] : memref<32x64xf32, #tpu.memory_space<vmem>>, vector<32x64xf32>
    %cst_15 = arith.constant dense<0.000000e+00> : vector<64x64xf32>
    %12 = tpu.matmul %5, %11, %cst_15 {dimension_numbers = #tpu.dot_dimension_numbers<[1], [0], [0], [1], [0, 0, 1, 1], [], []>} : vector<64x32xf32>, vector<32x64xf32>, vector<64x64xf32> -> vector<64x64xf32>
    %13 = arith.addf %10, %12 : vector<64x64xf32>
    %c0_16 = arith.constant 0 : index
    %c0_17 = arith.constant 0 : index
    %14 = vector.load %arg7[%c0_16, %c0_17] : memref<1x64xf32, #tpu.memory_space<vmem>>, vector<1x64xf32>
    %15 = vector.broadcast %14 : vector<1x64xf32> to vector<64x64xf32>
    %16 = arith.addf %13, %15 : vector<64x64xf32>
    %cst_18 = arith.constant 0.000000e+00 : f32
    %17 = vector.broadcast %cst_18 : f32 to vector<64x64xf32>
    %18 = arith.maximumf %16, %17 : vector<64x64xf32>
    %c0_19 = arith.constant 0 : index
    %c0_20 = arith.constant 0 : index
    %19 = vector.load %arg8[%c0_19, %c0_20] : memref<64x32xf32, #tpu.memory_space<vmem>>, vector<64x32xf32>
    %cst_21 = arith.constant dense<0.000000e+00> : vector<64x32xf32>
    %20 = tpu.matmul %18, %19, %cst_21 {dimension_numbers = #tpu.dot_dimension_numbers<[1], [0], [0], [1], [0, 0, 1, 1], [], []>} : vector<64x64xf32>, vector<64x32xf32>, vector<64x32xf32> -> vector<64x32xf32>
    %c0_22 = arith.constant 0 : index
    %c0_23 = arith.constant 0 : index
    %21 = vector.load %arg9[%c0_22, %c0_23] : memref<1x32xf32, #tpu.memory_space<vmem>>, vector<1x32xf32>
    %22 = vector.broadcast %21 : vector<1x32xf32> to vector<64x32xf32>
    %23 = arith.addf %20, %22 : vector<64x32xf32>
    %cst_24 = arith.constant 0.000000e+00 : f32
    %24 = vector.broadcast %cst_24 : f32 to vector<64x32xf32>
    %25 = arith.maximumf %23, %24 : vector<64x32xf32>
    %cst_25 = arith.constant 0.000000e+00 : f32
    %26 = vector.broadcast %cst_25 : f32 to vector<10x10x32xf32>
    %c0_26 = arith.constant 0 : index
    %c0_27 = arith.constant 0 : index
    %c0_28 = arith.constant 0 : index
    %27 = vector.load %arg15[%c0_26, %c0_27, %c0_28] : memref<10x10x32xf32, #tpu.memory_space<vmem>>, vector<10x10x32xf32>
    tpu.vector_store %arg15[%c0_26, %c0_27, %c0_28], %26 {strides = array<i32>} : memref<10x10x32xf32, #tpu.memory_space<vmem>>, vector<10x10x32xf32>,
    %28 = vector.shape_cast %25 : vector<64x32xf32> to vector<8x8x32xf32>
    %c1 = arith.constant 1 : index
    %c1_29 = arith.constant 1 : index
    %c0_30 = arith.constant 0 : index
    %29 = vector.load %arg15[%c1, %c1_29, %c0_30] : memref<10x10x32xf32, #tpu.memory_space<vmem>>, vector<8x8x32xf32>
    tpu.vector_store %arg15[%c1, %c1_29, %c0_30], %28 {strides = array<i32>} : memref<10x10x32xf32, #tpu.memory_space<vmem>>, vector<8x8x32xf32>,
    %cst_31 = arith.constant 0.000000e+00 : f32
    %30 = vector.broadcast %cst_31 : f32 to vector<64x32xf32>
    %c0_32 = arith.constant 0 : index
    %c0_33 = arith.constant 0 : index
    %c0_34 = arith.constant 0 : index
    %31 = vector.load %arg15[%c0_32, %c0_33, %c0_34] : memref<10x10x32xf32, #tpu.memory_space<vmem>>, vector<8x8x32xf32>
    %32 = vector.shape_cast %31 : vector<8x8x32xf32> to vector<64x32xf32>
    %c0_35 = arith.constant 0 : index
    %c0_36 = arith.constant 0 : index
    %c0_37 = arith.constant 0 : index
    %33 = vector.load %arg10[%c0_35, %c0_36, %c0_37] : memref<9x32x32xf32, #tpu.memory_space<vmem>>, vector<1x32x32xf32>
    %34 = vector.shape_cast %33 : vector<1x32x32xf32> to vector<32x32xf32>
    %cst_38 = arith.constant dense<0.000000e+00> : vector<64x32xf32>
    %35 = tpu.matmul %32, %34, %cst_38 {dimension_numbers = #tpu.dot_dimension_numbers<[1], [0], [0], [1], [0, 0, 1, 1], [], []>} : vector<64x32xf32>, vector<32x32xf32>, vector<64x32xf32> -> vector<64x32xf32>
    %36 = arith.addf %30, %35 : vector<64x32xf32>
    %c0_39 = arith.constant 0 : index
    %c1_40 = arith.constant 1 : index
    %c0_41 = arith.constant 0 : index
    %37 = vector.load %arg15[%c0_39, %c1_40, %c0_41] : memref<10x10x32xf32, #tpu.memory_space<vmem>>, vector<8x8x32xf32>
    %38 = vector.shape_cast %37 : vector<8x8x32xf32> to vector<64x32xf32>
    %c1_42 = arith.constant 1 : index
    %c0_43 = arith.constant 0 : index
    %c0_44 = arith.constant 0 : index
    %39 = vector.load %arg10[%c1_42, %c0_43, %c0_44] : memref<9x32x32xf32, #tpu.memory_space<vmem>>, vector<1x32x32xf32>
    %40 = vector.shape_cast %39 : vector<1x32x32xf32> to vector<32x32xf32>
    %cst_45 = arith.constant dense<0.000000e+00> : vector<64x32xf32>
    %41 = tpu.matmul %38, %40, %cst_45 {dimension_numbers = #tpu.dot_dimension_numbers<[1], [0], [0], [1], [0, 0, 1, 1], [], []>} : vector<64x32xf32>, vector<32x32xf32>, vector<64x32xf32> -> vector<64x32xf32>
    %42 = arith.addf %36, %41 : vector<64x32xf32>
    %c0_46 = arith.constant 0 : index
    %c2 = arith.constant 2 : index
    %c0_47 = arith.constant 0 : index
    %43 = vector.load %arg15[%c0_46, %c2, %c0_47] : memref<10x10x32xf32, #tpu.memory_space<vmem>>, vector<8x8x32xf32>
    %44 = vector.shape_cast %43 : vector<8x8x32xf32> to vector<64x32xf32>
    %c2_48 = arith.constant 2 : index
    %c0_49 = arith.constant 0 : index
    %c0_50 = arith.constant 0 : index
    %45 = vector.load %arg10[%c2_48, %c0_49, %c0_50] : memref<9x32x32xf32, #tpu.memory_space<vmem>>, vector<1x32x32xf32>
    %46 = vector.shape_cast %45 : vector<1x32x32xf32> to vector<32x32xf32>
    %cst_51 = arith.constant dense<0.000000e+00> : vector<64x32xf32>
    %47 = tpu.matmul %44, %46, %cst_51 {dimension_numbers = #tpu.dot_dimension_numbers<[1], [0], [0], [1], [0, 0, 1, 1], [], []>} : vector<64x32xf32>, vector<32x32xf32>, vector<64x32xf32> -> vector<64x32xf32>
    %48 = arith.addf %42, %47 : vector<64x32xf32>
    %c1_52 = arith.constant 1 : index
    %c0_53 = arith.constant 0 : index
    %c0_54 = arith.constant 0 : index
    %49 = vector.load %arg15[%c1_52, %c0_53, %c0_54] : memref<10x10x32xf32, #tpu.memory_space<vmem>>, vector<8x8x32xf32>
    %50 = vector.shape_cast %49 : vector<8x8x32xf32> to vector<64x32xf32>
    %c3 = arith.constant 3 : index
    %c0_55 = arith.constant 0 : index
    %c0_56 = arith.constant 0 : index
    %51 = vector.load %arg10[%c3, %c0_55, %c0_56] : memref<9x32x32xf32, #tpu.memory_space<vmem>>, vector<1x32x32xf32>
    %52 = vector.shape_cast %51 : vector<1x32x32xf32> to vector<32x32xf32>
    %cst_57 = arith.constant dense<0.000000e+00> : vector<64x32xf32>
    %53 = tpu.matmul %50, %52, %cst_57 {dimension_numbers = #tpu.dot_dimension_numbers<[1], [0], [0], [1], [0, 0, 1, 1], [], []>} : vector<64x32xf32>, vector<32x32xf32>, vector<64x32xf32> -> vector<64x32xf32>
    %54 = arith.addf %48, %53 : vector<64x32xf32>
    %c1_58 = arith.constant 1 : index
    %c1_59 = arith.constant 1 : index
    %c0_60 = arith.constant 0 : index
    %55 = vector.load %arg15[%c1_58, %c1_59, %c0_60] : memref<10x10x32xf32, #tpu.memory_space<vmem>>, vector<8x8x32xf32>
    %56 = vector.shape_cast %55 : vector<8x8x32xf32> to vector<64x32xf32>
    %c4 = arith.constant 4 : index
    %c0_61 = arith.constant 0 : index
    %c0_62 = arith.constant 0 : index
    %57 = vector.load %arg10[%c4, %c0_61, %c0_62] : memref<9x32x32xf32, #tpu.memory_space<vmem>>, vector<1x32x32xf32>
    %58 = vector.shape_cast %57 : vector<1x32x32xf32> to vector<32x32xf32>
    %cst_63 = arith.constant dense<0.000000e+00> : vector<64x32xf32>
    %59 = tpu.matmul %56, %58, %cst_63 {dimension_numbers = #tpu.dot_dimension_numbers<[1], [0], [0], [1], [0, 0, 1, 1], [], []>} : vector<64x32xf32>, vector<32x32xf32>, vector<64x32xf32> -> vector<64x32xf32>
    %60 = arith.addf %54, %59 : vector<64x32xf32>
    %c1_64 = arith.constant 1 : index
    %c2_65 = arith.constant 2 : index
    %c0_66 = arith.constant 0 : index
    %61 = vector.load %arg15[%c1_64, %c2_65, %c0_66] : memref<10x10x32xf32, #tpu.memory_space<vmem>>, vector<8x8x32xf32>
    %62 = vector.shape_cast %61 : vector<8x8x32xf32> to vector<64x32xf32>
    %c5 = arith.constant 5 : index
    %c0_67 = arith.constant 0 : index
    %c0_68 = arith.constant 0 : index
    %63 = vector.load %arg10[%c5, %c0_67, %c0_68] : memref<9x32x32xf32, #tpu.memory_space<vmem>>, vector<1x32x32xf32>
    %64 = vector.shape_cast %63 : vector<1x32x32xf32> to vector<32x32xf32>
    %cst_69 = arith.constant dense<0.000000e+00> : vector<64x32xf32>
    %65 = tpu.matmul %62, %64, %cst_69 {dimension_numbers = #tpu.dot_dimension_numbers<[1], [0], [0], [1], [0, 0, 1, 1], [], []>} : vector<64x32xf32>, vector<32x32xf32>, vector<64x32xf32> -> vector<64x32xf32>
    %66 = arith.addf %60, %65 : vector<64x32xf32>
    %c2_70 = arith.constant 2 : index
    %c0_71 = arith.constant 0 : index
    %c0_72 = arith.constant 0 : index
    %67 = vector.load %arg15[%c2_70, %c0_71, %c0_72] : memref<10x10x32xf32, #tpu.memory_space<vmem>>, vector<8x8x32xf32>
    %68 = vector.shape_cast %67 : vector<8x8x32xf32> to vector<64x32xf32>
    %c6 = arith.constant 6 : index
    %c0_73 = arith.constant 0 : index
    %c0_74 = arith.constant 0 : index
    %69 = vector.load %arg10[%c6, %c0_73, %c0_74] : memref<9x32x32xf32, #tpu.memory_space<vmem>>, vector<1x32x32xf32>
    %70 = vector.shape_cast %69 : vector<1x32x32xf32> to vector<32x32xf32>
    %cst_75 = arith.constant dense<0.000000e+00> : vector<64x32xf32>
    %71 = tpu.matmul %68, %70, %cst_75 {dimension_numbers = #tpu.dot_dimension_numbers<[1], [0], [0], [1], [0, 0, 1, 1], [], []>} : vector<64x32xf32>, vector<32x32xf32>, vector<64x32xf32> -> vector<64x32xf32>
    %72 = arith.addf %66, %71 : vector<64x32xf32>
    %c2_76 = arith.constant 2 : index
    %c1_77 = arith.constant 1 : index
    %c0_78 = arith.constant 0 : index
    %73 = vector.load %arg15[%c2_76, %c1_77, %c0_78] : memref<10x10x32xf32, #tpu.memory_space<vmem>>, vector<8x8x32xf32>
    %74 = vector.shape_cast %73 : vector<8x8x32xf32> to vector<64x32xf32>
    %c7 = arith.constant 7 : index
    %c0_79 = arith.constant 0 : index
    %c0_80 = arith.constant 0 : index
    %75 = vector.load %arg10[%c7, %c0_79, %c0_80] : memref<9x32x32xf32, #tpu.memory_space<vmem>>, vector<1x32x32xf32>
    %76 = vector.shape_cast %75 : vector<1x32x32xf32> to vector<32x32xf32>
    %cst_81 = arith.constant dense<0.000000e+00> : vector<64x32xf32>
    %77 = tpu.matmul %74, %76, %cst_81 {dimension_numbers = #tpu.dot_dimension_numbers<[1], [0], [0], [1], [0, 0, 1, 1], [], []>} : vector<64x32xf32>, vector<32x32xf32>, vector<64x32xf32> -> vector<64x32xf32>
    %78 = arith.addf %72, %77 : vector<64x32xf32>
    %c2_82 = arith.constant 2 : index
    %c2_83 = arith.constant 2 : index
    %c0_84 = arith.constant 0 : index
    %79 = vector.load %arg15[%c2_82, %c2_83, %c0_84] : memref<10x10x32xf32, #tpu.memory_space<vmem>>, vector<8x8x32xf32>
    %80 = vector.shape_cast %79 : vector<8x8x32xf32> to vector<64x32xf32>
    %c8 = arith.constant 8 : index
    %c0_85 = arith.constant 0 : index
    %c0_86 = arith.constant 0 : index
    %81 = vector.load %arg10[%c8, %c0_85, %c0_86] : memref<9x32x32xf32, #tpu.memory_space<vmem>>, vector<1x32x32xf32>
    %82 = vector.shape_cast %81 : vector<1x32x32xf32> to vector<32x32xf32>
    %cst_87 = arith.constant dense<0.000000e+00> : vector<64x32xf32>
    %83 = tpu.matmul %80, %82, %cst_87 {dimension_numbers = #tpu.dot_dimension_numbers<[1], [0], [0], [1], [0, 0, 1, 1], [], []>} : vector<64x32xf32>, vector<32x32xf32>, vector<64x32xf32> -> vector<64x32xf32>
    %84 = arith.addf %78, %83 : vector<64x32xf32>
    %c0_88 = arith.constant 0 : index
    %c0_89 = arith.constant 0 : index
    %85 = vector.load %arg11[%c0_88, %c0_89] : memref<1x32xf32, #tpu.memory_space<vmem>>, vector<1x32xf32>
    %86 = vector.broadcast %85 : vector<1x32xf32> to vector<64x32xf32>
    %87 = arith.addf %84, %86 : vector<64x32xf32>
    %88 = vector.shape_cast %87 : vector<64x32xf32> to vector<1x64x32xf32>
    %cst_90 = arith.constant dense<0.000000e+00> : vector<1xf32>
    %89 = vector.multi_reduction <add>, %88, %cst_90 [1, 2] : vector<1x64x32xf32> to vector<1xf32>
    %90 = vector.shape_cast %89 : vector<1xf32> to vector<1x1x1xf32>
    %91 = vector.extract %90[0, 0, 0] : f32 from vector<1x1x1xf32>
    %cst_91 = arith.constant 2.048000e+03 : f32
    %92 = arith.divf %91, %cst_91 : f32
    %93 = vector.broadcast %92 : f32 to vector<64x32xf32>
    %94 = arith.subf %87, %93 : vector<64x32xf32>
    %95 = arith.mulf %94, %94 : vector<64x32xf32>
    %96 = vector.shape_cast %95 : vector<64x32xf32> to vector<1x64x32xf32>
    %cst_92 = arith.constant dense<0.000000e+00> : vector<1xf32>
    %97 = vector.multi_reduction <add>, %96, %cst_92 [1, 2] : vector<1x64x32xf32> to vector<1xf32>
    %98 = vector.shape_cast %97 : vector<1xf32> to vector<1x1x1xf32>
    %99 = vector.extract %98[0, 0, 0] : f32 from vector<1x1x1xf32>
    %cst_93 = arith.constant 2.048000e+03 : f32
    %100 = arith.divf %99, %cst_93 : f32
    %cst_94 = arith.constant 9.99999974E-6 : f32
    %101 = arith.addf %100, %cst_94 : f32
    %102 = math.rsqrt %101 : f32
    %103 = vector.broadcast %102 : f32 to vector<64x32xf32>
    %104 = arith.mulf %94, %103 : vector<64x32xf32>
    %c0_95 = arith.constant 0 : index
    %c0_96 = arith.constant 0 : index
    %105 = vector.load %arg12[%c0_95, %c0_96] : memref<64x32xf32, #tpu.memory_space<vmem>>, vector<64x32xf32>
    %106 = arith.mulf %104, %105 : vector<64x32xf32>
    %c0_97 = arith.constant 0 : index
    %c0_98 = arith.constant 0 : index
    %107 = vector.load %arg13[%c0_97, %c0_98] : memref<64x32xf32, #tpu.memory_space<vmem>>, vector<64x32xf32>
    %108 = arith.addf %106, %107 : vector<64x32xf32>
    %109 = vector.shape_cast %108 : vector<64x32xf32> to vector<1x64x32xf32>
    %c0_99 = arith.constant 0 : index
    %c0_100 = arith.constant 0 : index
    %c0_101 = arith.constant 0 : index
    %110 = vector.load %arg14[%c0_99, %c0_100, %c0_101] : memref<1x64x32xf32, #tpu.memory_space<vmem>>, vector<1x64x32xf32>
    tpu.vector_store %arg14[%c0_99, %c0_100, %c0_101], %109 {strides = array<i32>} : memref<1x64x32xf32, #tpu.memory_space<vmem>>, vector<1x64x32xf32>,
    return
  }
  func.func @transform_0(%arg0: i32) -> (i32, i32, i32) {
    %c0_i32 = arith.constant 0 : i32
    %c0_i32_0 = arith.constant 0 : i32
    %c0_i32_1 = arith.constant 0 : i32
    return %arg0, %c0_i32, %c0_i32_0 : i32, i32, i32
  }
  func.func @transform_1(%arg0: i32) -> (i32, i32, i32) {
    %c0_i32 = arith.constant 0 : i32
    %c0_i32_0 = arith.constant 0 : i32
    %c0_i32_1 = arith.constant 0 : i32
    return %arg0, %c0_i32, %c0_i32_0 : i32, i32, i32
  }
  func.func @transform_2(%arg0: i32) -> (i32, i32, i32) {
    %c0_i32 = arith.constant 0 : i32
    %c0_i32_0 = arith.constant 0 : i32
    %c0_i32_1 = arith.constant 0 : i32
    return %arg0, %c0_i32, %c0_i32_0 : i32, i32, i32
  }
  func.func @transform_3(%arg0: i32) -> (i32, i32) {
    %c0_i32 = arith.constant 0 : i32
    %c0_i32_0 = arith.constant 0 : i32
    %c0_i32_1 = arith.constant 0 : i32
    return %c0_i32, %c0_i32_0 : i32, i32
  }
  func.func @transform_4(%arg0: i32) -> (i32, i32) {
    %c0_i32 = arith.constant 0 : i32
    %c0_i32_0 = arith.constant 0 : i32
    %c0_i32_1 = arith.constant 0 : i32
    return %c0_i32, %c0_i32_0 : i32, i32
  }
  func.func @transform_5(%arg0: i32) -> (i32, i32) {
    %c0_i32 = arith.constant 0 : i32
    %c0_i32_0 = arith.constant 0 : i32
    %c0_i32_1 = arith.constant 0 : i32
    return %c0_i32, %c0_i32_0 : i32, i32
  }
  func.func @transform_6(%arg0: i32) -> (i32, i32) {
    %c0_i32 = arith.constant 0 : i32
    %c0_i32_0 = arith.constant 0 : i32
    %c0_i32_1 = arith.constant 0 : i32
    return %c0_i32, %c0_i32_0 : i32, i32
  }
  func.func @transform_7(%arg0: i32) -> (i32, i32) {
    %c0_i32 = arith.constant 0 : i32
    %c0_i32_0 = arith.constant 0 : i32
    %c0_i32_1 = arith.constant 0 : i32
    return %c0_i32, %c0_i32_0 : i32, i32
  }
  func.func @transform_8(%arg0: i32) -> (i32, i32) {
    %c0_i32 = arith.constant 0 : i32
    %c0_i32_0 = arith.constant 0 : i32
    %c0_i32_1 = arith.constant 0 : i32
    return %c0_i32, %c0_i32_0 : i32, i32
  }
  func.func @transform_9(%arg0: i32) -> (i32, i32, i32) {
    %c0_i32 = arith.constant 0 : i32
    %c0_i32_0 = arith.constant 0 : i32
    %c0_i32_1 = arith.constant 0 : i32
    %c0_i32_2 = arith.constant 0 : i32
    return %c0_i32, %c0_i32_0, %c0_i32_1 : i32, i32, i32
  }
  func.func @transform_10(%arg0: i32) -> (i32, i32) {
    %c0_i32 = arith.constant 0 : i32
    %c0_i32_0 = arith.constant 0 : i32
    %c0_i32_1 = arith.constant 0 : i32
    return %c0_i32, %c0_i32_0 : i32, i32
  }
  func.func @transform_11(%arg0: i32) -> (i32, i32) {
    %c0_i32 = arith.constant 0 : i32
    %c0_i32_0 = arith.constant 0 : i32
    %c0_i32_1 = arith.constant 0 : i32
    return %c0_i32, %c0_i32_0 : i32, i32
  }
  func.func @transform_12(%arg0: i32) -> (i32, i32) {
    %c0_i32 = arith.constant 0 : i32
    %c0_i32_0 = arith.constant 0 : i32
    %c0_i32_1 = arith.constant 0 : i32
    return %c0_i32, %c0_i32_0 : i32, i32
  }
  func.func @transform_13(%arg0: i32) -> (i32, i32, i32) {
    %c0_i32 = arith.constant 0 : i32
    %c0_i32_0 = arith.constant 0 : i32
    %c0_i32_1 = arith.constant 0 : i32
    return %arg0, %c0_i32, %c0_i32_0 : i32, i32, i32
  }
}

</mosaic_0001>

<llo_original>
// kernel: encoder_forward_pallas.1
$region0: #{encoder_forward_pallas.1}
  #allocation0 [shape = 'u32[]', space=smem, size = 0x4, offset = 0x4, fixed_abs, tag = 'smem constant byte address 0x4 - core index']
  #allocation1 [shape = 'u32[144,128]{1,0:T(1,128)}', space=vmem, size = 0x12000, scoped, tag = 'internal scratch']
  #allocation2 [shape = 'f32[10,10,32]{2,1,0:T(8,128)}', space=vmem, size = 0x14000, scoped, tag = 'scratch operand']
  %s0 = inlined_call_operand.hbm [shape: f32[2,64,32], index: 0, kind: input, shape index: {}]
  %s1 = inlined_call_operand.hbm [shape: f32[2,64,32], index: 1, kind: input, shape index: {}]
  %s2 = inlined_call_operand.hbm [shape: f32[2,64,32], index: 2, kind: input, shape index: {}]
  %s3 = inlined_call_operand.hbm [shape: f32[32,64], index: 3, kind: input, shape index: {}]
  %s4 = inlined_call_operand.hbm [shape: f32[32,64], index: 4, kind: input, shape index: {}]
  %s5 = inlined_call_operand.hbm [shape: f32[32,64], index: 5, kind: input, shape index: {}]
  %s6 = inlined_call_operand.vmem [shape: f32[1,64], index: 6, kind: input, shape index: {}]
  %s7 = inlined_call_operand.vmem [shape: f32[64,32], index: 7, kind: input, shape index: {}]
  %s8 = inlined_call_operand.vmem [shape: f32[1,32], index: 8, kind: input, shape index: {}]
  %s9 = inlined_call_operand.vmem [shape: f32[9,32,32], index: 9, kind: input, shape index: {}]
  %s10 = inlined_call_operand.vmem [shape: f32[1,32], index: 10, kind: input, shape index: {}]
  %s11 = inlined_call_operand.vmem [shape: f32[64,32], index: 11, kind: input, shape index: {}]
  %s12 = inlined_call_operand.vmem [shape: f32[64,32], index: 12, kind: input, shape index: {}]
  %s13 = inlined_call_operand.hbm [shape: f32[2,64,32], index: 13, kind: output, shape index: {}]
  %s14 = sld [smem:[#allocation0]]
  $region109: #{encoder_forward_pallas.1} parent=0
    _
  %s16 = ssub.s32 1, %s14
  %s17 = scalar_select 0, %s16, %s14
  $region1: #{encoder_forward_pallas.1} parent=0
    #allocation3 [shape = 'u8[65536]{0}', space=vmem, size = 0x10000, scoped, tag = 'input window, operand 0']
    #allocation4 [shape = 's32[2]{0}', space=sflag, size = 0x8, scoped, tag = 'scoped memory for encoder_forward_pallas.1']
    #allocation5 [shape = 's32[2]{0}', space=sflag, size = 0x8, scoped, tag = 'scoped memory for encoder_forward_pallas.1']
    #allocation6 [shape = 'u8[65536]{0}', space=vmem, size = 0x10000, scoped, tag = 'input window, operand 1']
    #allocation7 [shape = 's32[2]{0}', space=sflag, size = 0x8, scoped, tag = 'scoped memory for encoder_forward_pallas.1']
    #allocation8 [shape = 'u8[65536]{0}', space=vmem, size = 0x10000, scoped, tag = 'input window, operand 2']
    #allocation9 [shape = 'u8[16384]{0}', space=vmem, size = 0x4000, scoped, tag = 'input window, operand 3, single buffered']
    #allocation10 [shape = 's32[1]{0}', space=sflag, size = 0x4, scoped, tag = 'scoped memory for encoder_forward_pallas.1']
    #allocation11 [shape = 'u8[16384]{0}', space=vmem, size = 0x4000, scoped, tag = 'input window, operand 4, single buffered']
    #allocation12 [shape = 'u8[16384]{0}', space=vmem, size = 0x4000, scoped, tag = 'input window, operand 5, single buffered']
    #allocation13 [shape = 's32[1]{0}', space=sflag, size = 0x4, scoped, tag = 'scoped memory for encoder_forward_pallas.1']
    #allocation14 [shape = 'u8[65536]{0}', space=vmem, size = 0x10000, scoped, tag = 'output window, operand 0']
    %18 = vsyncpa [#allocation4], 0
    %s19 = scalar_lea.sflag [#allocation4], 1
    %20 = vsyncpa %s19, 0
    %21 = vsyncpa [#allocation7], 0
    %s22 = scalar_lea.sflag [#allocation7], 1
    %23 = vsyncpa %s22, 0
    %24 = vsyncpa [#allocation10], 0
    %25 = vsyncpa [#allocation13], 0
    %26 = vsyncpa [#allocation5], 0
    %s27 = scalar_lea.sflag [#allocation5], 1
    %28 = vsyncpa %s27, 0
    loop: start=0, step=1, limit=4
    $region2: #{encoder_forward_pallas.1} parent=1 // loop_pre_header
      _
    $region3: #{encoder_forward_pallas.1} parent=1 // loop_header
      %s30 = sphi 0, %s34
      %p31 = scmp.ge.s32.totalorder %s30, 4
      %s40 = sphi 0, %s42
      %s43 = sphi 0, %s40
      %s44 = sphi 0, %s43
      %s60 = sphi 0, %s44
      %s66 = sphi 0, %s68
      %s69 = sphi 0, %s66
      %s70 = sphi 0, %s69
      %s86 = sphi 0, %s70
      %s92 = sphi 0, %s94
      %s95 = sphi 0, %s92
      %s96 = sphi 0, %s95
      %s112 = sphi 0, %s96
      %s116 = sphi 0, %s116
      %s118 = sphi 0, %s116
      %s119 = sphi 0, %s118
      %s133 = sphi 0, %s119
      %s137 = sphi 0, %s137
      %s139 = sphi 0, %s137
      %s140 = sphi 0, %s139
      %s154 = sphi 0, %s140
      %s158 = sphi 0, %s158
      %s160 = sphi 0, %s158
      %s161 = sphi 0, %s160
      %s175 = sphi 0, %s161
      %s179 = sphi 0, %s179
      %s181 = sphi 0, %s179
      %s182 = sphi 0, %s181
      %s196 = sphi 0, %s182
      %s200 = sphi 0, %s200
      %s202 = sphi 0, %s200
      %s203 = sphi 0, %s202
      %s217 = sphi 0, %s203
      %s221 = sphi 0, %s221
      %s223 = sphi 0, %s221
      %s224 = sphi 0, %s223
      %s238 = sphi 0, %s224
      %s242 = sphi 0, %s242
      %s244 = sphi 0, %s242
      %s245 = sphi 0, %s244
      %s259 = sphi 0, %s245
      %s263 = sphi 0, %s263
      %s265 = sphi 0, %s263
      %s266 = sphi 0, %s265
      %s280 = sphi 0, %s266
      %s284 = sphi 0, %s284
      %s286 = sphi 0, %s284
      %s287 = sphi 0, %s286
      %s301 = sphi 0, %s287
      %s305 = sphi 0, %s305
      %s307 = sphi 0, %s305
      %s308 = sphi 0, %s307
      %s322 = sphi 0, %s308
      %s328 = sphi 0, %s330
      %s331 = sphi 0, %s328
      %s332 = sphi 0, %s331
      %s348 = sphi 0, %s332
    $region4: #{encoder_forward_pallas.1} parent=1 // loop_header_branch
      %33 = sbr.rel (%p31) target = $region8
    $region5: #{encoder_forward_pallas.1} parent=1 // loop_body
      %s35 = ssub.s32 %s30, 1
      %s36 = ssub.s32 %s30, 2
      %s37 = sadd.s32 %s30, 1
      %s38 = ssub.s32 %s30, %s37
      %p39 = scmp.eq.s32.totalorder %s38, 0
      %s41 = sadd.s32 %s40, 1
      %s42 = scalar_select %p39, %s40, %s41
      %p45 = pneg %p39
      %p46 = scmp.eq.s32.totalorder %s30, 1
      %p47 = por %p45, %p46
      %p48 = scmp.ne.s32.totalorder %s40, %s43
      %p49 = scmp.eq.s32.totalorder %s30, 0
      %p50 = por %p48, %p49
      %p51 = scmp.ne.s32.totalorder %s40, %s43
      %p52 = scmp.eq.s32.totalorder %s35, 1
      %p53 = por %p51, %p52
      %p54 = scmp.ne.s32.totalorder %s43, %s44
      %p55 = scmp.eq.s32.totalorder %s35, 0
      %p56 = por %p54, %p55
      %p57 = scmp.ne.s32.totalorder %s43, %s44
      %p58 = scmp.eq.s32.totalorder %s36, 1
      %p59 = por %p57, %p58
      %p61 = scmp.ne.s32.totalorder %s44, %s60
      %p62 = scmp.eq.s32.totalorder %s36, 0
      %p63 = por %p61, %p62
      %s64 = ssub.s32 %s30, %s37
      %p65 = scmp.eq.s32.totalorder %s64, 0
      %s67 = sadd.s32 %s66, 1
      %s68 = scalar_select %p65, %s66, %s67
      %p71 = pneg %p65
      %p72 = scmp.eq.s32.totalorder %s30, 1
      %p73 = por %p71, %p72
      %p74 = scmp.ne.s32.totalorder %s66, %s69
      %p75 = scmp.eq.s32.totalorder %s30, 0
      %p76 = por %p74, %p75
      %p77 = scmp.ne.s32.totalorder %s66, %s69
      %p78 = scmp.eq.s32.totalorder %s35, 1
      %p79 = por %p77, %p78
      %p80 = scmp.ne.s32.totalorder %s69, %s70
      %p81 = scmp.eq.s32.totalorder %s35, 0
      %p82 = por %p80, %p81
      %p83 = scmp.ne.s32.totalorder %s69, %s70
      %p84 = scmp.eq.s32.totalorder %s36, 1
      %p85 = por %p83, %p84
      %p87 = scmp.ne.s32.totalorder %s70, %s86
      %p88 = scmp.eq.s32.totalorder %s36, 0
      %p89 = por %p87, %p88
      %s90 = ssub.s32 %s30, %s37
      %p91 = scmp.eq.s32.totalorder %s90, 0
      %s93 = sadd.s32 %s92, 1
      %s94 = scalar_select %p91, %s92, %s93
      %p97 = pneg %p91
      %p98 = scmp.eq.s32.totalorder %s30, 1
      %p99 = por %p97, %p98
      %p100 = scmp.ne.s32.totalorder %s92, %s95
      %p101 = scmp.eq.s32.totalorder %s30, 0
      %p102 = por %p100, %p101
      %p103 = scmp.ne.s32.totalorder %s92, %s95
      %p104 = scmp.eq.s32.totalorder %s35, 1
      %p105 = por %p103, %p104
      %p106 = scmp.ne.s32.totalorder %s95, %s96
      %p107 = scmp.eq.s32.totalorder %s35, 0
      %p108 = por %p106, %p107
      %p109 = scmp.ne.s32.totalorder %s95, %s96
      %p110 = scmp.eq.s32.totalorder %s36, 1
      %p111 = por %p109, %p110
      %p113 = scmp.ne.s32.totalorder %s96, %s112
      %p114 = scmp.eq.s32.totalorder %s36, 0
      %p115 = por %p113, %p114
      %s117 = sadd.s32 %s116, 1
      %p120 = scmp.eq.s32.totalorder %s30, 1
      %p121 = scmp.ne.s32.totalorder %s116, %s118
      %p122 = scmp.eq.s32.totalorder %s30, 0
      %p123 = por %p121, %p122
      %p124 = scmp.ne.s32.totalorder %s116, %s118
      %p125 = scmp.eq.s32.totalorder %s35, 1
      %p126 = por %p124, %p125
      %p127 = scmp.ne.s32.totalorder %s118, %s119
      %p128 = scmp.eq.s32.totalorder %s35, 0
      %p129 = por %p127, %p128
      %p130 = scmp.ne.s32.totalorder %s118, %s119
      %p131 = scmp.eq.s32.totalorder %s36, 1
      %p132 = por %p130, %p131
      %p134 = scmp.ne.s32.totalorder %s119, %s133
      %p135 = scmp.eq.s32.totalorder %s36, 0
      %p136 = por %p134, %p135
      %s138 = sadd.s32 %s137, 1
      %p141 = scmp.eq.s32.totalorder %s30, 1
      %p142 = scmp.ne.s32.totalorder %s137, %s139
      %p143 = scmp.eq.s32.totalorder %s30, 0
      %p144 = por %p142, %p143
      %p145 = scmp.ne.s32.totalorder %s137, %s139
      %p146 = scmp.eq.s32.totalorder %s35, 1
      %p147 = por %p145, %p146
      %p148 = scmp.ne.s32.totalorder %s139, %s140
      %p149 = scmp.eq.s32.totalorder %s35, 0
      %p150 = por %p148, %p149
      %p151 = scmp.ne.s32.totalorder %s139, %s140
      %p152 = scmp.eq.s32.totalorder %s36, 1
      %p153 = por %p151, %p152
      %p155 = scmp.ne.s32.totalorder %s140, %s154
      %p156 = scmp.eq.s32.totalorder %s36, 0
      %p157 = por %p155, %p156
      %s159 = sadd.s32 %s158, 1
      %p162 = scmp.eq.s32.totalorder %s30, 1
      %p163 = scmp.ne.s32.totalorder %s158, %s160
      %p164 = scmp.eq.s32.totalorder %s30, 0
      %p165 = por %p163, %p164
      %p166 = scmp.ne.s32.totalorder %s158, %s160
      %p167 = scmp.eq.s32.totalorder %s35, 1
      %p168 = por %p166, %p167
      %p169 = scmp.ne.s32.totalorder %s160, %s161
      %p170 = scmp.eq.s32.totalorder %s35, 0
      %p171 = por %p169, %p170
      %p172 = scmp.ne.s32.totalorder %s160, %s161
      %p173 = scmp.eq.s32.totalorder %s36, 1
      %p174 = por %p172, %p173
      %p176 = scmp.ne.s32.totalorder %s161, %s175
      %p177 = scmp.eq.s32.totalorder %s36, 0
      %p178 = por %p176, %p177
      %s180 = sadd.s32 %s179, 1
      %p183 = scmp.eq.s32.totalorder %s30, 1
      %p184 = scmp.ne.s32.totalorder %s179, %s181
      %p185 = scmp.eq.s32.totalorder %s30, 0
      %p186 = por %p184, %p185
      %p187 = scmp.ne.s32.totalorder %s179, %s181
      %p188 = scmp.eq.s32.totalorder %s35, 1
      %p189 = por %p187, %p188
      %p190 = scmp.ne.s32.totalorder %s181, %s182
      %p191 = scmp.eq.s32.totalorder %s35, 0
      %p192 = por %p190, %p191
      %p193 = scmp.ne.s32.totalorder %s181, %s182
      %p194 = scmp.eq.s32.totalorder %s36, 1
      %p195 = por %p193, %p194
      %p197 = scmp.ne.s32.totalorder %s182, %s196
      %p198 = scmp.eq.s32.totalorder %s36, 0
      %p199 = por %p197, %p198
      %s201 = sadd.s32 %s200, 1
      %p204 = scmp.eq.s32.totalorder %s30, 1
      %p205 = scmp.ne.s32.totalorder %s200, %s202
      %p206 = scmp.eq.s32.totalorder %s30, 0
      %p207 = por %p205, %p206
      %p208 = scmp.ne.s32.totalorder %s200, %s202
      %p209 = scmp.eq.s32.totalorder %s35, 1
      %p210 = por %p208, %p209
      %p211 = scmp.ne.s32.totalorder %s202, %s203
      %p212 = scmp.eq.s32.totalorder %s35, 0
      %p213 = por %p211, %p212
      %p214 = scmp.ne.s32.totalorder %s202, %s203
      %p215 = scmp.eq.s32.totalorder %s36, 1
      %p216 = por %p214, %p215
      %p218 = scmp.ne.s32.totalorder %s203, %s217
      %p219 = scmp.eq.s32.totalorder %s36, 0
      %p220 = por %p218, %p219
      %s222 = sadd.s32 %s221, 1
      %p225 = scmp.eq.s32.totalorder %s30, 1
      %p226 = scmp.ne.s32.totalorder %s221, %s223
      %p227 = scmp.eq.s32.totalorder %s30, 0
      %p228 = por %p226, %p227
      %p229 = scmp.ne.s32.totalorder %s221, %s223
      %p230 = scmp.eq.s32.totalorder %s35, 1
      %p231 = por %p229, %p230
      %p232 = scmp.ne.s32.totalorder %s223, %s224
      %p233 = scmp.eq.s32.totalorder %s35, 0
      %p234 = por %p232, %p233
      %p235 = scmp.ne.s32.totalorder %s223, %s224
      %p236 = scmp.eq.s32.totalorder %s36, 1
      %p237 = por %p235, %p236
      %p239 = scmp.ne.s32.totalorder %s224, %s238
      %p240 = scmp.eq.s32.totalorder %s36, 0
      %p241 = por %p239, %p240
      %s243 = sadd.s32 %s242, 1
      %p246 = scmp.eq.s32.totalorder %s30, 1
      %p247 = scmp.ne.s32.totalorder %s242, %s244
      %p248 = scmp.eq.s32.totalorder %s30, 0
      %p249 = por %p247, %p248
      %p250 = scmp.ne.s32.totalorder %s242, %s244
      %p251 = scmp.eq.s32.totalorder %s35, 1
      %p252 = por %p250, %p251
      %p253 = scmp.ne.s32.totalorder %s244, %s245
      %p254 = scmp.eq.s32.totalorder %s35, 0
      %p255 = por %p253, %p254
      %p256 = scmp.ne.s32.totalorder %s244, %s245
      %p257 = scmp.eq.s32.totalorder %s36, 1
      %p258 = por %p256, %p257
      %p260 = scmp.ne.s32.totalorder %s245, %s259
      %p261 = scmp.eq.s32.totalorder %s36, 0
      %p262 = por %p260, %p261
      %s264 = sadd.s32 %s263, 1
      %p267 = scmp.eq.s32.totalorder %s30, 1
      %p268 = scmp.ne.s32.totalorder %s263, %s265
      %p269 = scmp.eq.s32.totalorder %s30, 0
      %p270 = por %p268, %p269
      %p271 = scmp.ne.s32.totalorder %s263, %s265
      %p272 = scmp.eq.s32.totalorder %s35, 1
      %p273 = por %p271, %p272
      %p274 = scmp.ne.s32.totalorder %s265, %s266
      %p275 = scmp.eq.s32.totalorder %s35, 0
      %p276 = por %p274, %p275
      %p277 = scmp.ne.s32.totalorder %s265, %s266
      %p278 = scmp.eq.s32.totalorder %s36, 1
      %p279 = por %p277, %p278
      %p281 = scmp.ne.s32.totalorder %s266, %s280
      %p282 = scmp.eq.s32.totalorder %s36, 0
      %p283 = por %p281, %p282
      %s285 = sadd.s32 %s284, 1
      %p288 = scmp.eq.s32.totalorder %s30, 1
      %p289 = scmp.ne.s32.totalorder %s284, %s286
      %p290 = scmp.eq.s32.totalorder %s30, 0
      %p291 = por %p289, %p290
      %p292 = scmp.ne.s32.totalorder %s284, %s286
      %p293 = scmp.eq.s32.totalorder %s35, 1
      %p294 = por %p292, %p293
      %p295 = scmp.ne.s32.totalorder %s286, %s287
      %p296 = scmp.eq.s32.totalorder %s35, 0
      %p297 = por %p295, %p296
      %p298 = scmp.ne.s32.totalorder %s286, %s287
      %p299 = scmp.eq.s32.totalorder %s36, 1
      %p300 = por %p298, %p299
      %p302 = scmp.ne.s32.totalorder %s287, %s301
      %p303 = scmp.eq.s32.totalorder %s36, 0
      %p304 = por %p302, %p303
      %s306 = sadd.s32 %s305, 1
      %p309 = scmp.eq.s32.totalorder %s30, 1
      %p310 = scmp.ne.s32.totalorder %s305, %s307
      %p311 = scmp.eq.s32.totalorder %s30, 0
      %p312 = por %p310, %p311
      %p313 = scmp.ne.s32.totalorder %s305, %s307
      %p314 = scmp.eq.s32.totalorder %s35, 1
      %p315 = por %p313, %p314
      %p316 = scmp.ne.s32.totalorder %s307, %s308
      %p317 = scmp.eq.s32.totalorder %s35, 0
      %p318 = por %p316, %p317
      %p319 = scmp.ne.s32.totalorder %s307, %s308
      %p320 = scmp.eq.s32.totalorder %s36, 1
      %p321 = por %p319, %p320
      %p323 = scmp.ne.s32.totalorder %s308, %s322
      %p324 = scmp.eq.s32.totalorder %s36, 0
      %p325 = por %p323, %p324
      %s326 = ssub.s32 %s30, %s37
      %p327 = scmp.eq.s32.totalorder %s326, 0
      %s329 = sadd.s32 %s328, 1
      %s330 = scalar_select %p327, %s328, %s329
      %p333 = pneg %p327
      %p334 = scmp.eq.s32.totalorder %s30, 1
      %p335 = por %p333, %p334
      %p336 = scmp.ne.s32.totalorder %s328, %s331
      %p337 = scmp.eq.s32.totalorder %s30, 0
      %p338 = por %p336, %p337
      %p339 = scmp.ne.s32.totalorder %s328, %s331
      %p340 = scmp.eq.s32.totalorder %s35, 1
      %p341 = por %p339, %p340
      %p342 = scmp.ne.s32.totalorder %s331, %s332
      %p343 = scmp.eq.s32.totalorder %s35, 0
      %p344 = por %p342, %p343
      %p345 = scmp.ne.s32.totalorder %s331, %s332
      %p346 = scmp.eq.s32.totalorder %s36, 1
      %p347 = por %p345, %p346
      %p349 = scmp.ne.s32.totalorder %s332, %s348
      %p350 = scmp.eq.s32.totalorder %s36, 0
      %p351 = por %p349, %p350
      %p352 = scmp.le.s32.totalorder 1, %s30
      %p353 = scmp.lt.s32.totalorder %s30, 3
      %p354 = pnand %p352, %p353
      %p355 = pneg %p354
      // Predicated region
      $region9: #{encoder_forward_pallas.1} parent=5 // pred_check
        _
      $region10: #{encoder_forward_pallas.1} parent=5 // pred_check_branch
        %357 = sbr.rel (%p354) target = $region12
      $region11: #{encoder_forward_pallas.1} parent=5 // pred_region
        %s358 = ssub.s32 %s30, 1
        // Predicated region
        $region13: #{encoder_forward_pallas.1} parent=11 // pred_check
          %p359 = pneg %p129
        $region14: #{encoder_forward_pallas.1} parent=11 // pred_check_branch
          %361 = sbr.rel (%p359) target = $region16
        $region15: #{encoder_forward_pallas.1} parent=11 // pred_region
          %s363 = ssub.s32 512, 512
          %364 = vsyncadd [#allocation10], %s363
          %s365 = sshll.u32 [#allocation9], 4
          %s366 = int_to_ptr.vmem [resolvable:$true] %s365
          %371 = dma.hbm_to_vmem [thread:$0]  %s3, 512, %s366, [#allocation10], 128, 128, 8
        $region16: #{encoder_forward_pallas.1} parent=11 // pred_fallthru
          _
        // Predicated region
        $region17: #{encoder_forward_pallas.1} parent=11 // pred_check
          %p372 = pneg %p150
        $region18: #{encoder_forward_pallas.1} parent=11 // pred_check_branch
          %374 = sbr.rel (%p372) target = $region20
        $region19: #{encoder_forward_pallas.1} parent=11 // pred_region
          %s376 = ssub.s32 512, 512
          %377 = vsyncadd [#allocation10], %s376
          %s378 = sshll.u32 [#allocation11], 4
          %s379 = int_to_ptr.vmem [resolvable:$true] %s378
          %384 = dma.hbm_to_vmem [thread:$0]  %s4, 512, %s379, [#allocation10], 128, 128, 8
        $region20: #{encoder_forward_pallas.1} parent=11 // pred_fallthru
          _
        // Predicated region
        $region21: #{encoder_forward_pallas.1} parent=11 // pred_check
          %p385 = pneg %p171
        $region22: #{encoder_forward_pallas.1} parent=11 // pred_check_branch
          %387 = sbr.rel (%p385) target = $region24
        $region23: #{encoder_forward_pallas.1} parent=11 // pred_region
          %s389 = ssub.s32 512, 512
          %390 = vsyncadd [#allocation13], %s389
          %s391 = sshll.u32 [#allocation12], 4
          %s392 = int_to_ptr.vmem [resolvable:$true] %s391
          %397 = dma.hbm_to_vmem [thread:$0]  %s5, 512, %s392, [#allocation13], 128, 128, 8
        $region24: #{encoder_forward_pallas.1} parent=11 // pred_fallthru
          _
        // Predicated region
        $region25: #{encoder_forward_pallas.1} parent=11 // pred_check
          %p398 = pneg %p192
        $region26: #{encoder_forward_pallas.1} parent=11 // pred_check_branch
          %400 = sbr.rel (%p398) target = $region28
        $region27: #{encoder_forward_pallas.1} parent=11 // pred_region
          _
        $region28: #{encoder_forward_pallas.1} parent=11 // pred_fallthru
          _
        // Predicated region
        $region29: #{encoder_forward_pallas.1} parent=11 // pred_check
          %p401 = pneg %p213
        $region30: #{encoder_forward_pallas.1} parent=11 // pred_check_branch
          %403 = sbr.rel (%p401) target = $region32
        $region31: #{encoder_forward_pallas.1} parent=11 // pred_region
          _
        $region32: #{encoder_forward_pallas.1} parent=11 // pred_fallthru
          _
        // Predicated region
        $region33: #{encoder_forward_pallas.1} parent=11 // pred_check
          %p404 = pneg %p234
        $region34: #{encoder_forward_pallas.1} parent=11 // pred_check_branch
          %406 = sbr.rel (%p404) target = $region36
        $region35: #{encoder_forward_pallas.1} parent=11 // pred_region
          _
        $region36: #{encoder_forward_pallas.1} parent=11 // pred_fallthru
          _
        // Predicated region
        $region37: #{encoder_forward_pallas.1} parent=11 // pred_check
          %p407 = pneg %p255
        $region38: #{encoder_forward_pallas.1} parent=11 // pred_check_branch
          %409 = sbr.rel (%p407) target = $region40
        $region39: #{encoder_forward_pallas.1} parent=11 // pred_region
          _
        $region40: #{encoder_forward_pallas.1} parent=11 // pred_fallthru
          _
        // Predicated region
        $region41: #{encoder_forward_pallas.1} parent=11 // pred_check
          %p410 = pneg %p276
        $region42: #{encoder_forward_pallas.1} parent=11 // pred_check_branch
          %412 = sbr.rel (%p410) target = $region44
        $region43: #{encoder_forward_pallas.1} parent=11 // pred_region
          _
        $region44: #{encoder_forward_pallas.1} parent=11 // pred_fallthru
          _
        // Predicated region
        $region45: #{encoder_forward_pallas.1} parent=11 // pred_check
          %p413 = pneg %p297
        $region46: #{encoder_forward_pallas.1} parent=11 // pred_check_branch
          %415 = sbr.rel (%p413) target = $region48
        $region47: #{encoder_forward_pallas.1} parent=11 // pred_region
          _
        $region48: #{encoder_forward_pallas.1} parent=11 // pred_fallthru
          _
        // Predicated region
        $region49: #{encoder_forward_pallas.1} parent=11 // pred_check
          %p416 = pneg %p318
        $region50: #{encoder_forward_pallas.1} parent=11 // pred_check_branch
          %418 = sbr.rel (%p416) target = $region52
        $region51: #{encoder_forward_pallas.1} parent=11 // pred_region
          _
        $region52: #{encoder_forward_pallas.1} parent=11 // pred_fallthru
          _
      $region12: #{encoder_forward_pallas.1} parent=5 // pred_fallthru
        _
      %p419 = scmp.lt.s32.totalorder %s30, 2
      // Predicated region
      $region53: #{encoder_forward_pallas.1} parent=5 // pred_check
        %p420 = pneg %p419
      $region54: #{encoder_forward_pallas.1} parent=5 // pred_check_branch
        %422 = sbr.rel (%p420) target = $region56
      $region55: #{encoder_forward_pallas.1} parent=5 // pred_region
        // Predicated region
        $region57: #{encoder_forward_pallas.1} parent=55 // pred_check
          %p423 = pneg %p50
        $region58: #{encoder_forward_pallas.1} parent=55 // pred_check_branch
          %425 = sbr.rel (%p423) target = $region60
        $region59: #{encoder_forward_pallas.1} parent=55 // pred_region
          %s426 = sand.u32 %s40, 1
          %s427 = scalar_lea.sflag [#allocation4], %s426
          %s428 = sand.u32 %s40, 1
          %s429 = smul.addr %s428, 64
          %s430 = scalar_lea.vmem [#allocation3], %s429
          %s432 = ssub.s32 1024, 1024
          %433 = vsyncadd %s427, %s432
          %s434 = smul.addr %s30, 8
          %s435 = smul.addr %s434, 128
          %s436 = scalar_lea.hbm %s0, %s435
          %s437 = sshll.u32 %s430, 4
          %s438 = int_to_ptr.vmem [resolvable:$true] %s437
          %443 = dma.hbm_to_vmem [thread:$0]  %s436, 1024, %s438, %s427, 128, 128, 8
        $region60: #{encoder_forward_pallas.1} parent=55 // pred_fallthru
          _
        // Predicated region
        $region61: #{encoder_forward_pallas.1} parent=55 // pred_check
          %p444 = pneg %p76
        $region62: #{encoder_forward_pallas.1} parent=55 // pred_check_branch
          %446 = sbr.rel (%p444) target = $region64
        $region63: #{encoder_forward_pallas.1} parent=55 // pred_region
          %s447 = sand.u32 %s30, 1
          %s448 = scalar_lea.sflag [#allocation7], %s447
          %s449 = sand.u32 %s66, 1
          %s450 = smul.addr %s449, 64
          %s451 = scalar_lea.vmem [#allocation6], %s450
          %s453 = ssub.s32 1024, 1024
          %454 = vsyncadd %s448, %s453
          %s455 = smul.addr %s30, 8
          %s456 = smul.addr %s455, 128
          %s457 = scalar_lea.hbm %s1, %s456
          %s458 = sshll.u32 %s451, 4
          %s459 = int_to_ptr.vmem [resolvable:$true] %s458
          %464 = dma.hbm_to_vmem [thread:$0]  %s457, 1024, %s459, %s448, 128, 128, 8
        $region64: #{encoder_forward_pallas.1} parent=55 // pred_fallthru
          _
        // Predicated region
        $region65: #{encoder_forward_pallas.1} parent=55 // pred_check
          %p465 = pneg %p102
        $region66: #{encoder_forward_pallas.1} parent=55 // pred_check_branch
          %467 = sbr.rel (%p465) target = $region68
        $region67: #{encoder_forward_pallas.1} parent=55 // pred_region
          %s468 = sand.u32 %s30, 1
          %s469 = scalar_lea.sflag [#allocation7], %s468
          %s470 = sand.u32 %s92, 1
          %s471 = smul.addr %s470, 64
          %s472 = scalar_lea.vmem [#allocation8], %s471
          %s474 = ssub.s32 1024, 1024
          %475 = vsyncadd %s469, %s474
          %s476 = smul.addr %s30, 8
          %s477 = smul.addr %s476, 128
          %s478 = scalar_lea.hbm %s2, %s477
          %s479 = sshll.u32 %s472, 4
          %s480 = int_to_ptr.vmem [resolvable:$true] %s479
          %485 = dma.hbm_to_vmem [thread:$0]  %s478, 1024, %s480, %s469, 128, 128, 8
        $region68: #{encoder_forward_pallas.1} parent=55 // pred_fallthru
          _
      $region56: #{encoder_forward_pallas.1} parent=5 // pred_fallthru
        _
      %p486 = scmp.le.s32.totalorder 1, %s30
      %p487 = scmp.lt.s32.totalorder %s30, 3
      %p488 = pnand %p486, %p487
      %p489 = pneg %p488
      // Predicated region
      $region69: #{encoder_forward_pallas.1} parent=5 // pred_check
        _
      $region70: #{encoder_forward_pallas.1} parent=5 // pred_check_branch
        %491 = sbr.rel (%p488) target = $region72
      $region71: #{encoder_forward_pallas.1} parent=5 // pred_region
        %s492 = ssub.s32 %s30, 1
        %s493 = sand.u32 %s43, 1
        %s494 = scalar_lea.sflag [#allocation4], %s493
        %s495 = sand.u32 %s43, 1
        %s496 = smul.addr %s495, 64
        %s497 = scalar_lea.vmem [#allocation3], %s496
        // Predicated region
        $region73: #{encoder_forward_pallas.1} parent=71 // pred_check
          %p498 = pneg %p56
        $region74: #{encoder_forward_pallas.1} parent=71 // pred_check_branch
          %500 = sbr.rel (%p498) target = $region76
        $region75: #{encoder_forward_pallas.1} parent=71 // pred_region
          %501 = dma.done %s494, 1024
        $region76: #{encoder_forward_pallas.1} parent=71 // pred_fallthru
          _
        %s502 = sand.u32 %s35, 1
        %s503 = scalar_lea.sflag [#allocation7], %s502
        %s504 = sand.u32 %s69, 1
        %s505 = smul.addr %s504, 64
        %s506 = scalar_lea.vmem [#allocation6], %s505
        // Predicated region
        $region77: #{encoder_forward_pallas.1} parent=71 // pred_check
          %p507 = pneg %p82
        $region78: #{encoder_forward_pallas.1} parent=71 // pred_check_branch
          %509 = sbr.rel (%p507) target = $region80
        $region79: #{encoder_forward_pallas.1} parent=71 // pred_region
          %510 = dma.done %s503, 1024
        $region80: #{encoder_forward_pallas.1} parent=71 // pred_fallthru
          _
        %s511 = sand.u32 %s35, 1
        %s512 = scalar_lea.sflag [#allocation7], %s511
        %s513 = sand.u32 %s95, 1
        %s514 = smul.addr %s513, 64
        %s515 = scalar_lea.vmem [#allocation8], %s514
        // Predicated region
        $region81: #{encoder_forward_pallas.1} parent=71 // pred_check
          %p516 = pneg %p108
        $region82: #{encoder_forward_pallas.1} parent=71 // pred_check_branch
          %518 = sbr.rel (%p516) target = $region84
        $region83: #{encoder_forward_pallas.1} parent=71 // pred_region
          %519 = dma.done %s512, 1024
        $region84: #{encoder_forward_pallas.1} parent=71 // pred_fallthru
          _
        // Predicated region
        $region85: #{encoder_forward_pallas.1} parent=71 // pred_check
          %p520 = pneg %p129
        $region86: #{encoder_forward_pallas.1} parent=71 // pred_check_branch
          %522 = sbr.rel (%p520) target = $region88
        $region87: #{encoder_forward_pallas.1} parent=71 // pred_region
          %523 = dma.done [#allocation10], 512
        $region88: #{encoder_forward_pallas.1} parent=71 // pred_fallthru
          _
        // Predicated region
        $region89: #{encoder_forward_pallas.1} parent=71 // pred_check
          %p524 = pneg %p150
        $region90: #{encoder_forward_pallas.1} parent=71 // pred_check_branch
          %526 = sbr.rel (%p524) target = $region92
        $region91: #{encoder_forward_pallas.1} parent=71 // pred_region
          %527 = dma.done [#allocation10], 512
        $region92: #{encoder_forward_pallas.1} parent=71 // pred_fallthru
          _
        // Predicated region
        $region93: #{encoder_forward_pallas.1} parent=71 // pred_check
          %p528 = pneg %p171
        $region94: #{encoder_forward_pallas.1} parent=71 // pred_check_branch
          %530 = sbr.rel (%p528) target = $region96
        $region95: #{encoder_forward_pallas.1} parent=71 // pred_region
          %531 = dma.done [#allocation13], 512
        $region96: #{encoder_forward_pallas.1} parent=71 // pred_fallthru
          _
        %s532 = sand.u32 %s43, 1
        %s533 = scalar_lea.sflag [#allocation4], %s532
        %s534 = sand.u32 %s43, 1
        %s535 = smul.addr %s534, 64
        %s536 = scalar_lea.vmem [#allocation3], %s535
        %p537 = pneg %p56
        %p538 = pneg %p53
        %s539 = sand.u32 %s35, 1
        %s540 = scalar_lea.sflag [#allocation7], %s539
        %s541 = sand.u32 %s69, 1
        %s542 = smul.addr %s541, 64
        %s543 = scalar_lea.vmem [#allocation6], %s542
        %p544 = pneg %p82
        %p545 = pneg %p79
        %s546 = sand.u32 %s35, 1
        %s547 = scalar_lea.sflag [#allocation7], %s546
        %s548 = sand.u32 %s95, 1
        %s549 = smul.addr %s548, 64
        %s550 = scalar_lea.vmem [#allocation8], %s549
        %p551 = pneg %p108
        %p552 = pneg %p105
        %p553 = pneg %p129
        %p554 = pneg %p126
        %p555 = pneg %p150
        %p556 = pneg %p147
        %p557 = pneg %p171
        %p558 = pneg %p168
        %p559 = pneg %p192
        %p560 = pneg %p189
        %p561 = pneg %p213
        %p562 = pneg %p210
        %p563 = pneg %p234
        %p564 = pneg %p231
        %p565 = pneg %p255
        %p566 = pneg %p252
        %p567 = pneg %p276
        %p568 = pneg %p273
        %p569 = pneg %p297
        %p570 = pneg %p294
        %p571 = pneg %p318
        %p572 = pneg %p315
        %p573 = pneg %p344
        %p574 = pneg %p341
        %s575 = sand.u32 %s331, 1
        %s576 = scalar_lea.sflag [#allocation5], %s575
        %s577 = sand.u32 %s331, 1
        %s578 = smul.addr %s577, 64
        %s579 = scalar_lea.vmem [#allocation14], %s578
        %v580 = vld [vmem:[%s497] sm:$0xff]
        %v581 = vld [vmem:[%s497 + $0x8] sm:$0xff]
        %v582 = vld [vmem:[%s497 + $0x10] sm:$0xff]
        %v583 = vld [vmem:[%s497 + $0x18] sm:$0xff]
        %v584 = vld [vmem:[%s497 + $0x20] sm:$0xff]
        %v585 = vld [vmem:[%s497 + $0x28] sm:$0xff]
        %v586 = vld [vmem:[%s497 + $0x30] sm:$0xff]
        %v587 = vld [vmem:[%s497 + $0x38] sm:$0xff]
        %v588 = vld [vmem:[%s506] sm:$0xff]
        %v589 = vld [vmem:[%s506 + $0x8] sm:$0xff]
        %v590 = vld [vmem:[%s506 + $0x10] sm:$0xff]
        %v591 = vld [vmem:[%s506 + $0x18] sm:$0xff]
        %v592 = vld [vmem:[%s506 + $0x20] sm:$0xff]
        %v593 = vld [vmem:[%s506 + $0x28] sm:$0xff]
        %v594 = vld [vmem:[%s506 + $0x30] sm:$0xff]
        %v595 = vld [vmem:[%s506 + $0x38] sm:$0xff]
        %v596 = vld [vmem:[%s515] sm:$0xff]
        %v597 = vld [vmem:[%s515 + $0x8] sm:$0xff]
        %v598 = vld [vmem:[%s515 + $0x10] sm:$0xff]
        %v599 = vld [vmem:[%s515 + $0x18] sm:$0xff]
        %v600 = vld [vmem:[%s515 + $0x20] sm:$0xff]
        %v601 = vld [vmem:[%s515 + $0x28] sm:$0xff]
        %v602 = vld [vmem:[%s515 + $0x30] sm:$0xff]
        %v603 = vld [vmem:[%s515 + $0x38] sm:$0xff]
        %v604 = vld [vmem:[#allocation9] sm:$0xff]
        %v605 = vld [vmem:[#allocation9 + $0x8] sm:$0xff]
        %v606 = vld [vmem:[#allocation9 + $0x10] sm:$0xff]
        %v607 = vld [vmem:[#allocation9 + $0x18] sm:$0xff]
        %v608 = vld [vmem:[#allocation11] sm:$0xff]
        %v609 = vld [vmem:[#allocation11 + $0x8] sm:$0xff]
        %v610 = vld [vmem:[#allocation11 + $0x10] sm:$0xff]
        %v611 = vld [vmem:[#allocation11 + $0x18] sm:$0xff]
        %vm612 = vcmask 261120
        %v614 = vsel %vm612, %v588, 0
        %v617 = vsel %vm612, %v589, 0
        %v620 = vsel %vm612, %v590, 0
        %v623 = vsel %vm612, %v591, 0
        %v626 = vsel %vm612, %v592, 0
        %v629 = vsel %vm612, %v593, 0
        %v632 = vsel %vm612, %v594, 0
        %v635 = vsel %vm612, %v595, 0
        %637 = vmatprep.subr.mxu0 0.0
        %638 = vmatpush1.msra.mxu0 0.0
        %639 = vmatprep.subr.mxu0 0.0
        %640 = vmatpush1.msra.mxu0 0.0
        %641 = vmatprep.subr.mxu0 0.0
        %642 = vmatpush1.msra.mxu0 0.0
        %643 = vmatprep.subr.mxu0 0.0
        %644 = vmatpush1.msra.mxu0 0.0
        %645 = vmatprep.subr.mxu0 0.0
        %646 = vmatpush1.msra.mxu0 0.0
        %647 = vmatprep.subr.mxu0 0.0
        %648 = vmatpush1.msra.mxu0 0.0
        %649 = vmatprep.subr.mxu0 0.0
        %650 = vmatpush1.msra.mxu0 0.0
        %651 = vmatprep.subr.mxu0 0.0
        %652 = vmatpush1.msra.mxu0 0.0
        %653 = vmatprep.subr.mxu0 0.0
        %654 = vmatpush1.msra.mxu0 0.0
        %655 = vmatprep.subr.mxu0 0.0
        %656 = vmatpush1.msra.mxu0 0.0
        %657 = vmatprep.subr.mxu0 0.0
        %658 = vmatpush1.msra.mxu0 0.0
        %659 = vmatprep.subr.mxu0 0.0
        %660 = vmatpush1.msra.mxu0 0.0
        %661 = vmatprep.subr.mxu0 0.0
        %662 = vmatpush1.msra.mxu0 %v611
        %663 = vmatprep.subr.mxu0 0.0
        %664 = vmatpush1.msra.mxu0 %v610
        %665 = vmatprep.subr.mxu0 0.0
        %666 = vmatpush1.msra.mxu0 %v609
        %667 = vmatprep.subr.mxu0 0.0
        %668 = vmatpush1.msra.mxu0 %v608
        %669 = vmatprep.subr.mxu0 0.0
        %670 = vmatpush2.msra.mxu0 0.0
        %671 = vmatprep.subr.mxu0 0.0
        %672 = vmatpush2.msra.mxu0 0.0
        %673 = vmatprep.subr.mxu0 0.0
        %674 = vmatpush2.msra.mxu0 0.0
        %675 = vmatprep.subr.mxu0 0.0
        %676 = vmatpush2.msra.mxu0 0.0
        %677 = vmatprep.subr.mxu0 0.0
        %678 = vmatpush2.msra.mxu0 0.0
        %679 = vmatprep.subr.mxu0 0.0
        %680 = vmatpush2.msra.mxu0 0.0
        %681 = vmatprep.subr.mxu0 0.0
        %682 = vmatpush2.msra.mxu0 0.0
        %683 = vmatprep.subr.mxu0 0.0
        %684 = vmatpush2.msra.mxu0 0.0
        %685 = vmatprep.subr.mxu0 0.0
        %686 = vmatpush2.msra.mxu0 0.0
        %687 = vmatprep.subr.mxu0 0.0
        %688 = vmatpush2.msra.mxu0 0.0
        %689 = vmatprep.subr.mxu0 0.0
        %690 = vmatpush2.msra.mxu0 0.0
        %691 = vmatprep.subr.mxu0 0.0
        %692 = vmatpush2.msra.mxu0 0.0
        %693 = vmatprep.subr.mxu0 0.0
        %694 = vmatpush2.msra.mxu0 0.0
        %695 = vmatprep.subr.mxu0 0.0
        %696 = vmatpush2.msra.mxu0 0.0
        %697 = vmatprep.subr.mxu0 0.0
        %698 = vmatpush2.msra.mxu0 0.0
        %699 = vmatprep.subr.mxu0 0.0
        %700 = vmatpush2.msra.mxu0 0.0
        %701 = vmatprep.mubr.f32.mxu0 0.0
        %702 = vmatmul.mubr.f32.gmra.mxu0 %v614
        %v703 = vpop.f32.mrf.mxu0
        %v704 = vadd.f32 0.0, %v703
        %v705 = vpop.f32.mrf.mxu0
        %706 = vmatprep.mubr.f32.mxu0 0.0
        %707 = vmatmul.mubr.f32.gmra.mxu0 %v617
        %v708 = vpop.f32.mrf.mxu0
        %v709 = vadd.f32 0.0, %v708
        %v710 = vpop.f32.mrf.mxu0
        %711 = vmatprep.mubr.f32.mxu0 0.0
        %712 = vmatmul.mubr.f32.gmra.mxu0 %v620
        %v713 = vpop.f32.mrf.mxu0
        %v714 = vadd.f32 0.0, %v713
        %v715 = vpop.f32.mrf.mxu0
        %716 = vmatprep.mubr.f32.mxu0 0.0
        %717 = vmatmul.mubr.f32.gmra.mxu0 %v623
        %v718 = vpop.f32.mrf.mxu0
        %v719 = vadd.f32 0.0, %v718
        %v720 = vpop.f32.mrf.mxu0
        %721 = vmatprep.mubr.f32.mxu0 0.0
        %722 = vmatmul.mubr.f32.gmra.mxu0 %v626
        %v723 = vpop.f32.mrf.mxu0
        %v724 = vadd.f32 0.0, %v723
        %v725 = vpop.f32.mrf.mxu0
        %726 = vmatprep.mubr.f32.mxu0 0.0
        %727 = vmatmul.mubr.f32.gmra.mxu0 %v629
        %v728 = vpop.f32.mrf.mxu0
        %v729 = vadd.f32 0.0, %v728
        %v730 = vpop.f32.mrf.mxu0
        %731 = vmatprep.mubr.f32.mxu0 0.0
        %732 = vmatmul.mubr.f32.gmra.mxu0 %v632
        %v733 = vpop.f32.mrf.mxu0
        %v734 = vadd.f32 0.0, %v733
        %v735 = vpop.f32.mrf.mxu0
        %736 = vmatprep.mubr.f32.mxu0 0.0
        %737 = vmatmul.mubr.f32.gmra.mxu0 %v635
        %v738 = vpop.f32.mrf.mxu0
        %v739 = vadd.f32 0.0, %v738
        %v740 = vpop.f32.mrf.mxu0
        %741 = vdwg.mxu0
        %v743 = vsel %vm612, %v580, 0
        %v746 = vsel %vm612, %v581, 0
        %v749 = vsel %vm612, %v582, 0
        %v752 = vsel %vm612, %v583, 0
        %v755 = vsel %vm612, %v584, 0
        %v758 = vsel %vm612, %v585, 0
        %v761 = vsel %vm612, %v586, 0
        %v764 = vsel %vm612, %v587, 0
        %766 = vmatprep.subr.mxu0 0.0
        %767 = vmatpush1.msra.mxu0 0.0
        %768 = vmatprep.subr.mxu0 0.0
        %769 = vmatpush1.msra.mxu0 0.0
        %770 = vmatprep.subr.mxu0 0.0
        %771 = vmatpush1.msra.mxu0 0.0
        %772 = vmatprep.subr.mxu0 0.0
        %773 = vmatpush1.msra.mxu0 0.0
        %774 = vmatprep.subr.mxu0 0.0
        %775 = vmatpush1.msra.mxu0 0.0
        %776 = vmatprep.subr.mxu0 0.0
        %777 = vmatpush1.msra.mxu0 0.0
        %778 = vmatprep.subr.mxu0 0.0
        %779 = vmatpush1.msra.mxu0 0.0
        %780 = vmatprep.subr.mxu0 0.0
        %781 = vmatpush1.msra.mxu0 0.0
        %782 = vmatprep.subr.mxu0 0.0
        %783 = vmatpush1.msra.mxu0 0.0
        %784 = vmatprep.subr.mxu0 0.0
        %785 = vmatpush1.msra.mxu0 0.0
        %786 = vmatprep.subr.mxu0 0.0
        %787 = vmatpush1.msra.mxu0 0.0
        %788 = vmatprep.subr.mxu0 0.0
        %789 = vmatpush1.msra.mxu0 0.0
        %790 = vmatprep.subr.mxu0 0.0
        %791 = vmatpush1.msra.mxu0 %v607
        %792 = vmatprep.subr.mxu0 0.0
        %793 = vmatpush1.msra.mxu0 %v606
        %794 = vmatprep.subr.mxu0 0.0
        %795 = vmatpush1.msra.mxu0 %v605
        %796 = vmatprep.subr.mxu0 0.0
        %797 = vmatpush1.msra.mxu0 %v604
        %798 = vmatprep.subr.mxu0 0.0
        %799 = vmatpush2.msra.mxu0 0.0
        %800 = vmatprep.subr.mxu0 0.0
        %801 = vmatpush2.msra.mxu0 0.0
        %802 = vmatprep.subr.mxu0 0.0
        %803 = vmatpush2.msra.mxu0 0.0
        %804 = vmatprep.subr.mxu0 0.0
        %805 = vmatpush2.msra.mxu0 0.0
        %806 = vmatprep.subr.mxu0 0.0
        %807 = vmatpush2.msra.mxu0 0.0
        %808 = vmatprep.subr.mxu0 0.0
        %809 = vmatpush2.msra.mxu0 0.0
        %810 = vmatprep.subr.mxu0 0.0
        %811 = vmatpush2.msra.mxu0 0.0
        %812 = vmatprep.subr.mxu0 0.0
        %813 = vmatpush2.msra.mxu0 0.0
        %814 = vmatprep.subr.mxu0 0.0
        %815 = vmatpush2.msra.mxu0 0.0
        %816 = vmatprep.subr.mxu0 0.0
        %817 = vmatpush2.msra.mxu0 0.0
        %818 = vmatprep.subr.mxu0 0.0
        %819 = vmatpush2.msra.mxu0 0.0
        %820 = vmatprep.subr.mxu0 0.0
        %821 = vmatpush2.msra.mxu0 0.0
        %822 = vmatprep.subr.mxu0 0.0
        %823 = vmatpush2.msra.mxu0 0.0
        %824 = vmatprep.subr.mxu0 0.0
        %825 = vmatpush2.msra.mxu0 0.0
        %826 = vmatprep.subr.mxu0 0.0
        %827 = vmatpush2.msra.mxu0 0.0
        %828 = vmatprep.subr.mxu0 0.0
        %829 = vmatpush2.msra.mxu0 0.0
        %830 = vmatprep.mubr.f32.mxu0 0.0
        %831 = vmatmul.mubr.f32.gmra.mxu0 %v743
        %v832 = vpop.f32.mrf.mxu0
        %v833 = vadd.f32 %v704, %v832
        %v834 = vpop.f32.mrf.mxu0
        %835 = vmatprep.mubr.f32.mxu0 0.0
        %836 = vmatmul.mubr.f32.gmra.mxu0 %v746
        %v837 = vpop.f32.mrf.mxu0
        %v838 = vadd.f32 %v709, %v837
        %v839 = vpop.f32.mrf.mxu0
        %840 = vmatprep.mubr.f32.mxu0 0.0
        %841 = vmatmul.mubr.f32.gmra.mxu0 %v749
        %v842 = vpop.f32.mrf.mxu0
        %v843 = vadd.f32 %v714, %v842
        %v844 = vpop.f32.mrf.mxu0
        %845 = vmatprep.mubr.f32.mxu0 0.0
        %846 = vmatmul.mubr.f32.gmra.mxu0 %v752
        %v847 = vpop.f32.mrf.mxu0
        %v848 = vadd.f32 %v719, %v847
        %v849 = vpop.f32.mrf.mxu0
        %850 = vmatprep.mubr.f32.mxu0 0.0
        %851 = vmatmul.mubr.f32.gmra.mxu0 %v755
        %v852 = vpop.f32.mrf.mxu0
        %v853 = vadd.f32 %v724, %v852
        %v854 = vpop.f32.mrf.mxu0
        %855 = vmatprep.mubr.f32.mxu0 0.0
        %856 = vmatmul.mubr.f32.gmra.mxu0 %v758
        %v857 = vpop.f32.mrf.mxu0
        %v858 = vadd.f32 %v729, %v857
        %v859 = vpop.f32.mrf.mxu0
        %860 = vmatprep.mubr.f32.mxu0 0.0
        %861 = vmatmul.mubr.f32.gmra.mxu0 %v761
        %v862 = vpop.f32.mrf.mxu0
        %v863 = vadd.f32 %v734, %v862
        %v864 = vpop.f32.mrf.mxu0
        %865 = vmatprep.mubr.f32.mxu0 0.0
        %866 = vmatmul.mubr.f32.gmra.mxu0 %v764
        %v867 = vpop.f32.mrf.mxu0
        %v868 = vadd.f32 %v739, %v867
        %v869 = vpop.f32.mrf.mxu0
        %870 = vdwg.mxu0
        %v871 = vld [vmem:[#allocation12] sm:$0xff]
        %v872 = vld [vmem:[#allocation12 + $0x8] sm:$0xff]
        %v873 = vld [vmem:[#allocation12 + $0x10] sm:$0xff]
        %v874 = vld [vmem:[#allocation12 + $0x18] sm:$0xff]
        %v876 = vsel %vm612, %v596, 0
        %v879 = vsel %vm612, %v597, 0
        %v882 = vsel %vm612, %v598, 0
        %v885 = vsel %vm612, %v599, 0
        %v888 = vsel %vm612, %v600, 0
        %v891 = vsel %vm612, %v601, 0
        %v894 = vsel %vm612, %v602, 0
        %v897 = vsel %vm612, %v603, 0
        %899 = vmatprep.subr.mxu0 0.0
        %900 = vmatpush1.msra.mxu0 0.0
        %901 = vmatprep.subr.mxu0 0.0
        %902 = vmatpush1.msra.mxu0 0.0
        %903 = vmatprep.subr.mxu0 0.0
        %904 = vmatpush1.msra.mxu0 0.0
        %905 = vmatprep.subr.mxu0 0.0
        %906 = vmatpush1.msra.mxu0 0.0
        %907 = vmatprep.subr.mxu0 0.0
        %908 = vmatpush1.msra.mxu0 0.0
        %909 = vmatprep.subr.mxu0 0.0
        %910 = vmatpush1.msra.mxu0 0.0
        %911 = vmatprep.subr.mxu0 0.0
        %912 = vmatpush1.msra.mxu0 0.0
        %913 = vmatprep.subr.mxu0 0.0
        %914 = vmatpush1.msra.mxu0 0.0
        %915 = vmatprep.subr.mxu0 0.0
        %916 = vmatpush1.msra.mxu0 0.0
        %917 = vmatprep.subr.mxu0 0.0
        %918 = vmatpush1.msra.mxu0 0.0
        %919 = vmatprep.subr.mxu0 0.0
        %920 = vmatpush1.msra.mxu0 0.0
        %921 = vmatprep.subr.mxu0 0.0
        %922 = vmatpush1.msra.mxu0 0.0
        %923 = vmatprep.subr.mxu0 0.0
        %924 = vmatpush1.msra.mxu0 %v874
        %925 = vmatprep.subr.mxu0 0.0
        %926 = vmatpush1.msra.mxu0 %v873
        %927 = vmatprep.subr.mxu0 0.0
        %928 = vmatpush1.msra.mxu0 %v872
        %929 = vmatprep.subr.mxu0 0.0
        %930 = vmatpush1.msra.mxu0 %v871
        %931 = vmatprep.subr.mxu0 0.0
        %932 = vmatpush2.msra.mxu0 0.0
        %933 = vmatprep.subr.mxu0 0.0
        %934 = vmatpush2.msra.mxu0 0.0
        %935 = vmatprep.subr.mxu0 0.0
        %936 = vmatpush2.msra.mxu0 0.0
        %937 = vmatprep.subr.mxu0 0.0
        %938 = vmatpush2.msra.mxu0 0.0
        %939 = vmatprep.subr.mxu0 0.0
        %940 = vmatpush2.msra.mxu0 0.0
        %941 = vmatprep.subr.mxu0 0.0
        %942 = vmatpush2.msra.mxu0 0.0
        %943 = vmatprep.subr.mxu0 0.0
        %944 = vmatpush2.msra.mxu0 0.0
        %945 = vmatprep.subr.mxu0 0.0
        %946 = vmatpush2.msra.mxu0 0.0
        %947 = vmatprep.subr.mxu0 0.0
        %948 = vmatpush2.msra.mxu0 0.0
        %949 = vmatprep.subr.mxu0 0.0
        %950 = vmatpush2.msra.mxu0 0.0
        %951 = vmatprep.subr.mxu0 0.0
        %952 = vmatpush2.msra.mxu0 0.0
        %953 = vmatprep.subr.mxu0 0.0
        %954 = vmatpush2.msra.mxu0 0.0
        %955 = vmatprep.subr.mxu0 0.0
        %956 = vmatpush2.msra.mxu0 0.0
        %957 = vmatprep.subr.mxu0 0.0
        %958 = vmatpush2.msra.mxu0 0.0
        %959 = vmatprep.subr.mxu0 0.0
        %960 = vmatpush2.msra.mxu0 0.0
        %961 = vmatprep.subr.mxu0 0.0
        %962 = vmatpush2.msra.mxu0 0.0
        %963 = vmatprep.mubr.f32.mxu0 0.0
        %964 = vmatmul.mubr.f32.gmra.mxu0 %v876
        %v965 = vpop.f32.mrf.mxu0
        %v966 = vadd.f32 0.0, %v965
        %v967 = vpop.f32.mrf.mxu0
        %968 = vmatprep.mubr.f32.mxu0 0.0
        %969 = vmatmul.mubr.f32.gmra.mxu0 %v879
        %v970 = vpop.f32.mrf.mxu0
        %v971 = vadd.f32 0.0, %v970
        %v972 = vpop.f32.mrf.mxu0
        %973 = vmatprep.mubr.f32.mxu0 0.0
        %974 = vmatmul.mubr.f32.gmra.mxu0 %v882
        %v975 = vpop.f32.mrf.mxu0
        %v976 = vadd.f32 0.0, %v975
        %v977 = vpop.f32.mrf.mxu0
        %978 = vmatprep.mubr.f32.mxu0 0.0
        %979 = vmatmul.mubr.f32.gmra.mxu0 %v885
        %v980 = vpop.f32.mrf.mxu0
        %v981 = vadd.f32 0.0, %v980
        %v982 = vpop.f32.mrf.mxu0
        %983 = vmatprep.mubr.f32.mxu0 0.0
        %984 = vmatmul.mubr.f32.gmra.mxu0 %v888
        %v985 = vpop.f32.mrf.mxu0
        %v986 = vadd.f32 0.0, %v985
        %v987 = vpop.f32.mrf.mxu0
        %988 = vmatprep.mubr.f32.mxu0 0.0
        %989 = vmatmul.mubr.f32.gmra.mxu0 %v891
        %v990 = vpop.f32.mrf.mxu0
        %v991 = vadd.f32 0.0, %v990
        %v992 = vpop.f32.mrf.mxu0
        %993 = vmatprep.mubr.f32.mxu0 0.0
        %994 = vmatmul.mubr.f32.gmra.mxu0 %v894
        %v995 = vpop.f32.mrf.mxu0
        %v996 = vadd.f32 0.0, %v995
        %v997 = vpop.f32.mrf.mxu0
        %998 = vmatprep.mubr.f32.mxu0 0.0
        %999 = vmatmul.mubr.f32.gmra.mxu0 %v897
        %v1000 = vpop.f32.mrf.mxu0
        %v1001 = vadd.f32 0.0, %v1000
        %v1002 = vpop.f32.mrf.mxu0
        %1003 = vdwg.mxu0
        %v1004 = vadd.f32 %v833, %v966
        %v1005 = vadd.f32 %v838, %v971
        %v1006 = vadd.f32 %v843, %v976
        %v1007 = vadd.f32 %v848, %v981
        %v1008 = vadd.f32 %v853, %v986
        %v1009 = vadd.f32 %v858, %v991
        %v1010 = vadd.f32 %v863, %v996
        %v1011 = vadd.f32 %v868, %v1001
        %v1012 = vld [vmem:[%s6] sm:$0x1]
        %v1014 = vlaneseq
        %v1015 = vshrl.u32 %v1014, 7
        %v1016 = vsub.s32 0, %v1015
        %v1017 = vrot.slane %v1012, %v1016
        %v1019 = vadd.f32 %v1004, %v1017
        %v1020 = vadd.f32 %v1005, %v1017
        %v1021 = vadd.f32 %v1006, %v1017
        %v1022 = vadd.f32 %v1007, %v1017
        %v1023 = vadd.f32 %v1008, %v1017
        %v1024 = vadd.f32 %v1009, %v1017
        %v1025 = vadd.f32 %v1010, %v1017
        %v1026 = vadd.f32 %v1011, %v1017
        %v1027 = vmax.f32 %v1019, 0.0
        %v1028 = vmax.f32 %v1020, 0.0
        %v1029 = vmax.f32 %v1021, 0.0
        %v1030 = vmax.f32 %v1022, 0.0
        %v1031 = vmax.f32 %v1023, 0.0
        %v1032 = vmax.f32 %v1024, 0.0
        %v1033 = vmax.f32 %v1025, 0.0
        %v1034 = vmax.f32 %v1026, 0.0
        %v1035 = vld [vmem:[%s7] sm:$0xff]
        %v1036 = vld [vmem:[%s7 + $0x8] sm:$0xff]
        %v1037 = vld [vmem:[%s7 + $0x10] sm:$0xff]
        %v1038 = vld [vmem:[%s7 + $0x18] sm:$0xff]
        %v1039 = vld [vmem:[%s7 + $0x20] sm:$0xff]
        %v1040 = vld [vmem:[%s7 + $0x28] sm:$0xff]
        %v1041 = vld [vmem:[%s7 + $0x30] sm:$0xff]
        %v1042 = vld [vmem:[%s7 + $0x38] sm:$0xff]
        %v1043 = vld [vmem:[%s8] sm:$0x1]
        %v1045 = vlaneseq
        %v1046 = vshrl.u32 %v1045, 7
        %v1047 = vsub.s32 0, %v1046
        %v1048 = vrot.slane %v1043, %v1047
        %vm1050 = vcmask 523264
        %v1052 = vsel %vm1050, %v1027, 0
        %v1055 = vsel %vm1050, %v1028, 0
        %v1058 = vsel %vm1050, %v1029, 0
        %v1061 = vsel %vm1050, %v1030, 0
        %v1064 = vsel %vm1050, %v1031, 0
        %v1067 = vsel %vm1050, %v1032, 0
        %v1070 = vsel %vm1050, %v1033, 0
        %v1073 = vsel %vm1050, %v1034, 0
        %1075 = vmatprep.subr.mxu0 0.0
        %1076 = vmatpush1.msra.mxu0 0.0
        %1077 = vmatprep.subr.mxu0 0.0
        %1078 = vmatpush1.msra.mxu0 0.0
        %1079 = vmatprep.subr.mxu0 0.0
        %1080 = vmatpush1.msra.mxu0 0.0
        %1081 = vmatprep.subr.mxu0 0.0
        %1082 = vmatpush1.msra.mxu0 0.0
        %1083 = vmatprep.subr.mxu0 0.0
        %1084 = vmatpush1.msra.mxu0 0.0
        %1085 = vmatprep.subr.mxu0 0.0
        %1086 = vmatpush1.msra.mxu0 0.0
        %1087 = vmatprep.subr.mxu0 0.0
        %1088 = vmatpush1.msra.mxu0 0.0
        %1089 = vmatprep.subr.mxu0 0.0
        %1090 = vmatpush1.msra.mxu0 0.0
        %1091 = vmatprep.subr.mxu0 0.0
        %1092 = vmatpush1.msra.mxu0 %v1042
        %1093 = vmatprep.subr.mxu0 0.0
        %1094 = vmatpush1.msra.mxu0 %v1041
        %1095 = vmatprep.subr.mxu0 0.0
        %1096 = vmatpush1.msra.mxu0 %v1040
        %1097 = vmatprep.subr.mxu0 0.0
        %1098 = vmatpush1.msra.mxu0 %v1039
        %1099 = vmatprep.subr.mxu0 0.0
        %1100 = vmatpush1.msra.mxu0 %v1038
        %1101 = vmatprep.subr.mxu0 0.0
        %1102 = vmatpush1.msra.mxu0 %v1037
        %1103 = vmatprep.subr.mxu0 0.0
        %1104 = vmatpush1.msra.mxu0 %v1036
        %1105 = vmatprep.subr.mxu0 0.0
        %1106 = vmatpush1.msra.mxu0 %v1035
        %1107 = vmatprep.subr.mxu0 0.0
        %1108 = vmatpush2.msra.mxu0 0.0
        %1109 = vmatprep.subr.mxu0 0.0
        %1110 = vmatpush2.msra.mxu0 0.0
        %1111 = vmatprep.subr.mxu0 0.0
        %1112 = vmatpush2.msra.mxu0 0.0
        %1113 = vmatprep.subr.mxu0 0.0
        %1114 = vmatpush2.msra.mxu0 0.0
        %1115 = vmatprep.subr.mxu0 0.0
        %1116 = vmatpush2.msra.mxu0 0.0
        %1117 = vmatprep.subr.mxu0 0.0
        %1118 = vmatpush2.msra.mxu0 0.0
        %1119 = vmatprep.subr.mxu0 0.0
        %1120 = vmatpush2.msra.mxu0 0.0
        %1121 = vmatprep.subr.mxu0 0.0
        %1122 = vmatpush2.msra.mxu0 0.0
        %1123 = vmatprep.subr.mxu0 0.0
        %1124 = vmatpush2.msra.mxu0 0.0
        %1125 = vmatprep.subr.mxu0 0.0
        %1126 = vmatpush2.msra.mxu0 0.0
        %1127 = vmatprep.subr.mxu0 0.0
        %1128 = vmatpush2.msra.mxu0 0.0
        %1129 = vmatprep.subr.mxu0 0.0
        %1130 = vmatpush2.msra.mxu0 0.0
        %1131 = vmatprep.subr.mxu0 0.0
        %1132 = vmatpush2.msra.mxu0 0.0
        %1133 = vmatprep.subr.mxu0 0.0
        %1134 = vmatpush2.msra.mxu0 0.0
        %1135 = vmatprep.subr.mxu0 0.0
        %1136 = vmatpush2.msra.mxu0 0.0
        %1137 = vmatprep.subr.mxu0 0.0
        %1138 = vmatpush2.msra.mxu0 0.0
        %1139 = vmatprep.mubr.f32.mxu0 0.0
        %1140 = vmatmul.mubr.f32.gmra.mxu0 %v1052
        %v1141 = vpop.f32.mrf.mxu0
        %v1142 = vadd.f32 %v1048, %v1141
        %v1143 = vpop.f32.mrf.mxu0
        %1144 = vmatprep.mubr.f32.mxu0 0.0
        %1145 = vmatmul.mubr.f32.gmra.mxu0 %v1055
        %v1146 = vpop.f32.mrf.mxu0
        %v1147 = vadd.f32 %v1048, %v1146
        %v1148 = vpop.f32.mrf.mxu0
        %1149 = vmatprep.mubr.f32.mxu0 0.0
        %1150 = vmatmul.mubr.f32.gmra.mxu0 %v1058
        %v1151 = vpop.f32.mrf.mxu0
        %v1152 = vadd.f32 %v1048, %v1151
        %v1153 = vpop.f32.mrf.mxu0
        %1154 = vmatprep.mubr.f32.mxu0 0.0
        %1155 = vmatmul.mubr.f32.gmra.mxu0 %v1061
        %v1156 = vpop.f32.mrf.mxu0
        %v1157 = vadd.f32 %v1048, %v1156
        %v1158 = vpop.f32.mrf.mxu0
        %1159 = vmatprep.mubr.f32.mxu0 0.0
        %1160 = vmatmul.mubr.f32.gmra.mxu0 %v1064
        %v1161 = vpop.f32.mrf.mxu0
        %v1162 = vadd.f32 %v1048, %v1161
        %v1163 = vpop.f32.mrf.mxu0
        %1164 = vmatprep.mubr.f32.mxu0 0.0
        %1165 = vmatmul.mubr.f32.gmra.mxu0 %v1067
        %v1166 = vpop.f32.mrf.mxu0
        %v1167 = vadd.f32 %v1048, %v1166
        %v1168 = vpop.f32.mrf.mxu0
        %1169 = vmatprep.mubr.f32.mxu0 0.0
        %1170 = vmatmul.mubr.f32.gmra.mxu0 %v1070
        %v1171 = vpop.f32.mrf.mxu0
        %v1172 = vadd.f32 %v1048, %v1171
        %v1173 = vpop.f32.mrf.mxu0
        %1174 = vmatprep.mubr.f32.mxu0 0.0
        %1175 = vmatmul.mubr.f32.gmra.mxu0 %v1073
        %v1176 = vpop.f32.mrf.mxu0
        %v1177 = vadd.f32 %v1048, %v1176
        %v1178 = vpop.f32.mrf.mxu0
        %1179 = vdwg.mxu0
        %v1180 = vmax.f32 %v1142, 0.0
        %v1181 = vmax.f32 %v1147, 0.0
        %v1182 = vmax.f32 %v1152, 0.0
        %v1183 = vmax.f32 %v1157, 0.0
        %v1184 = vmax.f32 %v1162, 0.0
        %v1185 = vmax.f32 %v1167, 0.0
        %v1186 = vmax.f32 %v1172, 0.0
        %v1187 = vmax.f32 %v1177, 0.0
        %1188 = vst.msk [vmem:[#allocation2] sm:$0xff] %vm612, 0.0
        %vm1189 = vcmask 254976
        %1190 = vst.msk [vmem:[#allocation2 + $0x8] sm:$0x3] %vm1189, 0.0
        %1191 = vst.msk [vmem:[#allocation2 + $0x10] sm:$0xff] %vm612, 0.0
        %1192 = vst.msk [vmem:[#allocation2 + $0x18] sm:$0x3] %vm1189, 0.0
        %1193 = vst.msk [vmem:[#allocation2 + $0x20] sm:$0xff] %vm612, 0.0
        %1194 = vst.msk [vmem:[#allocation2 + $0x28] sm:$0x3] %vm1189, 0.0
        %1195 = vst.msk [vmem:[#allocation2 + $0x30] sm:$0xff] %vm612, 0.0
        %1196 = vst.msk [vmem:[#allocation2 + $0x38] sm:$0x3] %vm1189, 0.0
        %1197 = vst.msk [vmem:[#allocation2 + $0x40] sm:$0xff] %vm612, 0.0
        %1198 = vst.msk [vmem:[#allocation2 + $0x48] sm:$0x3] %vm1189, 0.0
        %1199 = vst.msk [vmem:[#allocation2 + $0x50] sm:$0xff] %vm612, 0.0
        %1200 = vst.msk [vmem:[#allocation2 + $0x58] sm:$0x3] %vm1189, 0.0
        %1201 = vst.msk [vmem:[#allocation2 + $0x60] sm:$0xff] %vm612, 0.0
        %1202 = vst.msk [vmem:[#allocation2 + $0x68] sm:$0x3] %vm1189, 0.0
        %1203 = vst.msk [vmem:[#allocation2 + $0x70] sm:$0xff] %vm612, 0.0
        %1204 = vst.msk [vmem:[#allocation2 + $0x78] sm:$0x3] %vm1189, 0.0
        %1205 = vst.msk [vmem:[#allocation2 + $0x80] sm:$0xff] %vm612, 0.0
        %1206 = vst.msk [vmem:[#allocation2 + $0x88] sm:$0x3] %vm1189, 0.0
        %1207 = vst.msk [vmem:[#allocation2 + $0x90] sm:$0xff] %vm612, 0.0
        %1208 = vst.msk [vmem:[#allocation2 + $0x98] sm:$0x3] %vm1189, 0.0
        %s1209 = scalar_lea.vmem [#allocation2], 16
        %1210 = vst.msk [vmem:[%s1209 + $0x1] sm:$0xff] %vm612, %v1180
        %1211 = vst.msk [vmem:[%s1209 + $0x11] sm:$0xff] %vm612, %v1181
        %1212 = vst.msk [vmem:[%s1209 + $0x21] sm:$0xff] %vm612, %v1182
        %1213 = vst.msk [vmem:[%s1209 + $0x31] sm:$0xff] %vm612, %v1183
        %1214 = vst.msk [vmem:[%s1209 + $0x41] sm:$0xff] %vm612, %v1184
        %1215 = vst.msk [vmem:[%s1209 + $0x51] sm:$0xff] %vm612, %v1185
        %1216 = vst.msk [vmem:[%s1209 + $0x61] sm:$0xff] %vm612, %v1186
        %1217 = vst.msk [vmem:[%s1209 + $0x71] sm:$0xff] %vm612, %v1187
        %v1218 = vld [vmem:[#allocation2] sm:$0xff]
        %v1219 = vld [vmem:[#allocation2 + $0x10] sm:$0xff]
        %v1220 = vld [vmem:[#allocation2 + $0x20] sm:$0xff]
        %v1221 = vld [vmem:[#allocation2 + $0x30] sm:$0xff]
        %v1222 = vld [vmem:[#allocation2 + $0x40] sm:$0xff]
        %v1223 = vld [vmem:[#allocation2 + $0x50] sm:$0xff]
        %v1224 = vld [vmem:[#allocation2 + $0x60] sm:$0xff]
        %v1225 = vld [vmem:[#allocation2 + $0x70] sm:$0xff]
        %v1226 = vld [vmem:[%s9] sm:$0xff]
        %v1227 = vld [vmem:[%s9 + $0x8] sm:$0xff]
        %v1228 = vld [vmem:[%s9 + $0x10] sm:$0xff]
        %v1229 = vld [vmem:[%s9 + $0x18] sm:$0xff]
        %v1230 = vld [vmem:[#allocation2 + $0x1] sm:$0xff]
        %v1231 = vld [vmem:[#allocation2 + $0x11] sm:$0xff]
        %v1232 = vld [vmem:[#allocation2 + $0x21] sm:$0xff]
        %v1233 = vld [vmem:[#allocation2 + $0x31] sm:$0xff]
        %v1234 = vld [vmem:[#allocation2 + $0x41] sm:$0xff]
        %v1235 = vld [vmem:[#allocation2 + $0x51] sm:$0xff]
        %v1236 = vld [vmem:[#allocation2 + $0x61] sm:$0xff]
        %v1237 = vld [vmem:[#allocation2 + $0x71] sm:$0xff]
        %s1238 = scalar_lea.vmem %s9, 32
        %v1239 = vld [vmem:[%s1238] sm:$0xff]
        %v1240 = vld [vmem:[%s1238 + $0x8] sm:$0xff]
        %v1241 = vld [vmem:[%s1238 + $0x10] sm:$0xff]
        %v1242 = vld [vmem:[%s1238 + $0x18] sm:$0xff]
        %v1244 = vsel %vm612, %v1230, 0
        %v1247 = vsel %vm612, %v1231, 0
        %v1250 = vsel %vm612, %v1232, 0
        %v1253 = vsel %vm612, %v1233, 0
        %v1256 = vsel %vm612, %v1234, 0
        %v1259 = vsel %vm612, %v1235, 0
        %v1262 = vsel %vm612, %v1236, 0
        %v1265 = vsel %vm612, %v1237, 0
        %1267 = vmatprep.subr.mxu0 0.0
        %1268 = vmatpush1.msra.mxu0 0.0
        %1269 = vmatprep.subr.mxu0 0.0
        %1270 = vmatpush1.msra.mxu0 0.0
        %1271 = vmatprep.subr.mxu0 0.0
        %1272 = vmatpush1.msra.mxu0 0.0
        %1273 = vmatprep.subr.mxu0 0.0
        %1274 = vmatpush1.msra.mxu0 0.0
        %1275 = vmatprep.subr.mxu0 0.0
        %1276 = vmatpush1.msra.mxu0 0.0
        %1277 = vmatprep.subr.mxu0 0.0
        %1278 = vmatpush1.msra.mxu0 0.0
        %1279 = vmatprep.subr.mxu0 0.0
        %1280 = vmatpush1.msra.mxu0 0.0
        %1281 = vmatprep.subr.mxu0 0.0
        %1282 = vmatpush1.msra.mxu0 0.0
        %1283 = vmatprep.subr.mxu0 0.0
        %1284 = vmatpush1.msra.mxu0 0.0
        %1285 = vmatprep.subr.mxu0 0.0
        %1286 = vmatpush1.msra.mxu0 0.0
        %1287 = vmatprep.subr.mxu0 0.0
        %1288 = vmatpush1.msra.mxu0 0.0
        %1289 = vmatprep.subr.mxu0 0.0
        %1290 = vmatpush1.msra.mxu0 0.0
        %1291 = vmatprep.subr.mxu0 0.0
        %1292 = vmatpush1.msra.mxu0 %v1242
        %1293 = vmatprep.subr.mxu0 0.0
        %1294 = vmatpush1.msra.mxu0 %v1241
        %1295 = vmatprep.subr.mxu0 0.0
        %1296 = vmatpush1.msra.mxu0 %v1240
        %1297 = vmatprep.subr.mxu0 0.0
        %1298 = vmatpush1.msra.mxu0 %v1239
        %1299 = vmatprep.subr.mxu0 0.0
        %1300 = vmatpush2.msra.mxu0 0.0
        %1301 = vmatprep.subr.mxu0 0.0
        %1302 = vmatpush2.msra.mxu0 0.0
        %1303 = vmatprep.subr.mxu0 0.0
        %1304 = vmatpush2.msra.mxu0 0.0
        %1305 = vmatprep.subr.mxu0 0.0
        %1306 = vmatpush2.msra.mxu0 0.0
        %1307 = vmatprep.subr.mxu0 0.0
        %1308 = vmatpush2.msra.mxu0 0.0
        %1309 = vmatprep.subr.mxu0 0.0
        %1310 = vmatpush2.msra.mxu0 0.0
        %1311 = vmatprep.subr.mxu0 0.0
        %1312 = vmatpush2.msra.mxu0 0.0
        %1313 = vmatprep.subr.mxu0 0.0
        %1314 = vmatpush2.msra.mxu0 0.0
        %1315 = vmatprep.subr.mxu0 0.0
        %1316 = vmatpush2.msra.mxu0 0.0
        %1317 = vmatprep.subr.mxu0 0.0
        %1318 = vmatpush2.msra.mxu0 0.0
        %1319 = vmatprep.subr.mxu0 0.0
        %1320 = vmatpush2.msra.mxu0 0.0
        %1321 = vmatprep.subr.mxu0 0.0
        %1322 = vmatpush2.msra.mxu0 0.0
        %1323 = vmatprep.subr.mxu0 0.0
        %1324 = vmatpush2.msra.mxu0 0.0
        %1325 = vmatprep.subr.mxu0 0.0
        %1326 = vmatpush2.msra.mxu0 0.0
        %1327 = vmatprep.subr.mxu0 0.0
        %1328 = vmatpush2.msra.mxu0 0.0
        %1329 = vmatprep.subr.mxu0 0.0
        %1330 = vmatpush2.msra.mxu0 0.0
        %1331 = vmatprep.mubr.f32.mxu0 0.0
        %1332 = vmatmul.mubr.f32.gmra.mxu0 %v1244
        %v1333 = vpop.f32.mrf.mxu0
        %v1334 = vadd.f32 0.0, %v1333
        %v1335 = vpop.f32.mrf.mxu0
        %1336 = vmatprep.mubr.f32.mxu0 0.0
        %1337 = vmatmul.mubr.f32.gmra.mxu0 %v1247
        %v1338 = vpop.f32.mrf.mxu0
        %v1339 = vadd.f32 0.0, %v1338
        %v1340 = vpop.f32.mrf.mxu0
        %1341 = vmatprep.mubr.f32.mxu0 0.0
        %1342 = vmatmul.mubr.f32.gmra.mxu0 %v1250
        %v1343 = vpop.f32.mrf.mxu0
        %v1344 = vadd.f32 0.0, %v1343
        %v1345 = vpop.f32.mrf.mxu0
        %1346 = vmatprep.mubr.f32.mxu0 0.0
        %1347 = vmatmul.mubr.f32.gmra.mxu0 %v1253
        %v1348 = vpop.f32.mrf.mxu0
        %v1349 = vadd.f32 0.0, %v1348
        %v1350 = vpop.f32.mrf.mxu0
        %1351 = vmatprep.mubr.f32.mxu0 0.0
        %1352 = vmatmul.mubr.f32.gmra.mxu0 %v1256
        %v1353 = vpop.f32.mrf.mxu0
        %v1354 = vadd.f32 0.0, %v1353
        %v1355 = vpop.f32.mrf.mxu0
        %1356 = vmatprep.mubr.f32.mxu0 0.0
        %1357 = vmatmul.mubr.f32.gmra.mxu0 %v1259
        %v1358 = vpop.f32.mrf.mxu0
        %v1359 = vadd.f32 0.0, %v1358
        %v1360 = vpop.f32.mrf.mxu0
        %1361 = vmatprep.mubr.f32.mxu0 0.0
        %1362 = vmatmul.mubr.f32.gmra.mxu0 %v1262
        %v1363 = vpop.f32.mrf.mxu0
        %v1364 = vadd.f32 0.0, %v1363
        %v1365 = vpop.f32.mrf.mxu0
        %1366 = vmatprep.mubr.f32.mxu0 0.0
        %1367 = vmatmul.mubr.f32.gmra.mxu0 %v1265
        %v1368 = vpop.f32.mrf.mxu0
        %v1369 = vadd.f32 0.0, %v1368
        %v1370 = vpop.f32.mrf.mxu0
        %1371 = vdwg.mxu0
        %v1373 = vsel %vm612, %v1218, 0
        %v1376 = vsel %vm612, %v1219, 0
        %v1379 = vsel %vm612, %v1220, 0
        %v1382 = vsel %vm612, %v1221, 0
        %v1385 = vsel %vm612, %v1222, 0
        %v1388 = vsel %vm612, %v1223, 0
        %v1391 = vsel %vm612, %v1224, 0
        %v1394 = vsel %vm612, %v1225, 0
        %1396 = vmatprep.subr.mxu0 0.0
        %1397 = vmatpush1.msra.mxu0 0.0
        %1398 = vmatprep.subr.mxu0 0.0
        %1399 = vmatpush1.msra.mxu0 0.0
        %1400 = vmatprep.subr.mxu0 0.0
        %1401 = vmatpush1.msra.mxu0 0.0
        %1402 = vmatprep.subr.mxu0 0.0
        %1403 = vmatpush1.msra.mxu0 0.0
        %1404 = vmatprep.subr.mxu0 0.0
        %1405 = vmatpush1.msra.mxu0 0.0
        %1406 = vmatprep.subr.mxu0 0.0
        %1407 = vmatpush1.msra.mxu0 0.0
        %1408 = vmatprep.subr.mxu0 0.0
        %1409 = vmatpush1.msra.mxu0 0.0
        %1410 = vmatprep.subr.mxu0 0.0
        %1411 = vmatpush1.msra.mxu0 0.0
        %1412 = vmatprep.subr.mxu0 0.0
        %1413 = vmatpush1.msra.mxu0 0.0
        %1414 = vmatprep.subr.mxu0 0.0
        %1415 = vmatpush1.msra.mxu0 0.0
        %1416 = vmatprep.subr.mxu0 0.0
        %1417 = vmatpush1.msra.mxu0 0.0
        %1418 = vmatprep.subr.mxu0 0.0
        %1419 = vmatpush1.msra.mxu0 0.0
        %1420 = vmatprep.subr.mxu0 0.0
        %1421 = vmatpush1.msra.mxu0 %v1229
        %1422 = vmatprep.subr.mxu0 0.0
        %1423 = vmatpush1.msra.mxu0 %v1228
        %1424 = vmatprep.subr.mxu0 0.0
        %1425 = vmatpush1.msra.mxu0 %v1227
        %1426 = vmatprep.subr.mxu0 0.0
        %1427 = vmatpush1.msra.mxu0 %v1226
        %1428 = vmatprep.subr.mxu0 0.0
        %1429 = vmatpush2.msra.mxu0 0.0
        %1430 = vmatprep.subr.mxu0 0.0
        %1431 = vmatpush2.msra.mxu0 0.0
        %1432 = vmatprep.subr.mxu0 0.0
        %1433 = vmatpush2.msra.mxu0 0.0
        %1434 = vmatprep.subr.mxu0 0.0
        %1435 = vmatpush2.msra.mxu0 0.0
        %1436 = vmatprep.subr.mxu0 0.0
        %1437 = vmatpush2.msra.mxu0 0.0
        %1438 = vmatprep.subr.mxu0 0.0
        %1439 = vmatpush2.msra.mxu0 0.0
        %1440 = vmatprep.subr.mxu0 0.0
        %1441 = vmatpush2.msra.mxu0 0.0
        %1442 = vmatprep.subr.mxu0 0.0
        %1443 = vmatpush2.msra.mxu0 0.0
        %1444 = vmatprep.subr.mxu0 0.0
        %1445 = vmatpush2.msra.mxu0 0.0
        %1446 = vmatprep.subr.mxu0 0.0
        %1447 = vmatpush2.msra.mxu0 0.0
        %1448 = vmatprep.subr.mxu0 0.0
        %1449 = vmatpush2.msra.mxu0 0.0
        %1450 = vmatprep.subr.mxu0 0.0
        %1451 = vmatpush2.msra.mxu0 0.0
        %1452 = vmatprep.subr.mxu0 0.0
        %1453 = vmatpush2.msra.mxu0 0.0
        %1454 = vmatprep.subr.mxu0 0.0
        %1455 = vmatpush2.msra.mxu0 0.0
        %1456 = vmatprep.subr.mxu0 0.0
        %1457 = vmatpush2.msra.mxu0 0.0
        %1458 = vmatprep.subr.mxu0 0.0
        %1459 = vmatpush2.msra.mxu0 0.0
        %1460 = vmatprep.mubr.f32.mxu0 0.0
        %1461 = vmatmul.mubr.f32.gmra.mxu0 %v1373
        %v1462 = vpop.f32.mrf.mxu0
        %v1463 = vadd.f32 %v1334, %v1462
        %v1464 = vpop.f32.mrf.mxu0
        %1465 = vmatprep.mubr.f32.mxu0 0.0
        %1466 = vmatmul.mubr.f32.gmra.mxu0 %v1376
        %v1467 = vpop.f32.mrf.mxu0
        %v1468 = vadd.f32 %v1339, %v1467
        %v1469 = vpop.f32.mrf.mxu0
        %1470 = vmatprep.mubr.f32.mxu0 0.0
        %1471 = vmatmul.mubr.f32.gmra.mxu0 %v1379
        %v1472 = vpop.f32.mrf.mxu0
        %v1473 = vadd.f32 %v1344, %v1472
        %v1474 = vpop.f32.mrf.mxu0
        %1475 = vmatprep.mubr.f32.mxu0 0.0
        %1476 = vmatmul.mubr.f32.gmra.mxu0 %v1382
        %v1477 = vpop.f32.mrf.mxu0
        %v1478 = vadd.f32 %v1349, %v1477
        %v1479 = vpop.f32.mrf.mxu0
        %1480 = vmatprep.mubr.f32.mxu0 0.0
        %1481 = vmatmul.mubr.f32.gmra.mxu0 %v1385
        %v1482 = vpop.f32.mrf.mxu0
        %v1483 = vadd.f32 %v1354, %v1482
        %v1484 = vpop.f32.mrf.mxu0
        %1485 = vmatprep.mubr.f32.mxu0 0.0
        %1486 = vmatmul.mubr.f32.gmra.mxu0 %v1388
        %v1487 = vpop.f32.mrf.mxu0
        %v1488 = vadd.f32 %v1359, %v1487
        %v1489 = vpop.f32.mrf.mxu0
        %1490 = vmatprep.mubr.f32.mxu0 0.0
        %1491 = vmatmul.mubr.f32.gmra.mxu0 %v1391
        %v1492 = vpop.f32.mrf.mxu0
        %v1493 = vadd.f32 %v1364, %v1492
        %v1494 = vpop.f32.mrf.mxu0
        %1495 = vmatprep.mubr.f32.mxu0 0.0
        %1496 = vmatmul.mubr.f32.gmra.mxu0 %v1394
        %v1497 = vpop.f32.mrf.mxu0
        %v1498 = vadd.f32 %v1369, %v1497
        %v1499 = vpop.f32.mrf.mxu0
        %1500 = vdwg.mxu0
        %v1501 = vld [vmem:[#allocation2 + $0x2] sm:$0xff]
        %v1502 = vld [vmem:[#allocation2 + $0x12] sm:$0xff]
        %v1503 = vld [vmem:[#allocation2 + $0x22] sm:$0xff]
        %v1504 = vld [vmem:[#allocation2 + $0x32] sm:$0xff]
        %v1505 = vld [vmem:[#allocation2 + $0x42] sm:$0xff]
        %v1506 = vld [vmem:[#allocation2 + $0x52] sm:$0xff]
        %v1507 = vld [vmem:[#allocation2 + $0x62] sm:$0xff]
        %v1508 = vld [vmem:[#allocation2 + $0x72] sm:$0xff]
        %s1509 = scalar_lea.vmem %s9, 64
        %v1510 = vld [vmem:[%s1509] sm:$0xff]
        %v1511 = vld [vmem:[%s1509 + $0x8] sm:$0xff]
        %v1512 = vld [vmem:[%s1509 + $0x10] sm:$0xff]
        %v1513 = vld [vmem:[%s1509 + $0x18] sm:$0xff]
        %v1515 = vsel %vm612, %v1501, 0
        %v1518 = vsel %vm612, %v1502, 0
        %v1521 = vsel %vm612, %v1503, 0
        %v1524 = vsel %vm612, %v1504, 0
        %v1527 = vsel %vm612, %v1505, 0
        %v1530 = vsel %vm612, %v1506, 0
        %v1533 = vsel %vm612, %v1507, 0
        %v1536 = vsel %vm612, %v1508, 0
        %1538 = vmatprep.subr.mxu0 0.0
        %1539 = vmatpush1.msra.mxu0 0.0
        %1540 = vmatprep.subr.mxu0 0.0
        %1541 = vmatpush1.msra.mxu0 0.0
        %1542 = vmatprep.subr.mxu0 0.0
        %1543 = vmatpush1.msra.mxu0 0.0
        %1544 = vmatprep.subr.mxu0 0.0
        %1545 = vmatpush1.msra.mxu0 0.0
        %1546 = vmatprep.subr.mxu0 0.0
        %1547 = vmatpush1.msra.mxu0 0.0
        %1548 = vmatprep.subr.mxu0 0.0
        %1549 = vmatpush1.msra.mxu0 0.0
        %1550 = vmatprep.subr.mxu0 0.0
        %1551 = vmatpush1.msra.mxu0 0.0
        %1552 = vmatprep.subr.mxu0 0.0
        %1553 = vmatpush1.msra.mxu0 0.0
        %1554 = vmatprep.subr.mxu0 0.0
        %1555 = vmatpush1.msra.mxu0 0.0
        %1556 = vmatprep.subr.mxu0 0.0
        %1557 = vmatpush1.msra.mxu0 0.0
        %1558 = vmatprep.subr.mxu0 0.0
        %1559 = vmatpush1.msra.mxu0 0.0
        %1560 = vmatprep.subr.mxu0 0.0
        %1561 = vmatpush1.msra.mxu0 0.0
        %1562 = vmatprep.subr.mxu0 0.0
        %1563 = vmatpush1.msra.mxu0 %v1513
        %1564 = vmatprep.subr.mxu0 0.0
        %1565 = vmatpush1.msra.mxu0 %v1512
        %1566 = vmatprep.subr.mxu0 0.0
        %1567 = vmatpush1.msra.mxu0 %v1511
        %1568 = vmatprep.subr.mxu0 0.0
        %1569 = vmatpush1.msra.mxu0 %v1510
        %1570 = vmatprep.subr.mxu0 0.0
        %1571 = vmatpush2.msra.mxu0 0.0
        %1572 = vmatprep.subr.mxu0 0.0
        %1573 = vmatpush2.msra.mxu0 0.0
        %1574 = vmatprep.subr.mxu0 0.0
        %1575 = vmatpush2.msra.mxu0 0.0
        %1576 = vmatprep.subr.mxu0 0.0
        %1577 = vmatpush2.msra.mxu0 0.0
        %1578 = vmatprep.subr.mxu0 0.0
        %1579 = vmatpush2.msra.mxu0 0.0
        %1580 = vmatprep.subr.mxu0 0.0
        %1581 = vmatpush2.msra.mxu0 0.0
        %1582 = vmatprep.subr.mxu0 0.0
        %1583 = vmatpush2.msra.mxu0 0.0
        %1584 = vmatprep.subr.mxu0 0.0
        %1585 = vmatpush2.msra.mxu0 0.0
        %1586 = vmatprep.subr.mxu0 0.0
        %1587 = vmatpush2.msra.mxu0 0.0
        %1588 = vmatprep.subr.mxu0 0.0
        %1589 = vmatpush2.msra.mxu0 0.0
        %1590 = vmatprep.subr.mxu0 0.0
        %1591 = vmatpush2.msra.mxu0 0.0
        %1592 = vmatprep.subr.mxu0 0.0
        %1593 = vmatpush2.msra.mxu0 0.0
        %1594 = vmatprep.subr.mxu0 0.0
        %1595 = vmatpush2.msra.mxu0 0.0
        %1596 = vmatprep.subr.mxu0 0.0
        %1597 = vmatpush2.msra.mxu0 0.0
        %1598 = vmatprep.subr.mxu0 0.0
        %1599 = vmatpush2.msra.mxu0 0.0
        %1600 = vmatprep.subr.mxu0 0.0
        %1601 = vmatpush2.msra.mxu0 0.0
        %1602 = vmatprep.mubr.f32.mxu0 0.0
        %1603 = vmatmul.mubr.f32.gmra.mxu0 %v1515
        %v1604 = vpop.f32.mrf.mxu0
        %v1605 = vadd.f32 0.0, %v1604
        %v1606 = vpop.f32.mrf.mxu0
        %1607 = vmatprep.mubr.f32.mxu0 0.0
        %1608 = vmatmul.mubr.f32.gmra.mxu0 %v1518
        %v1609 = vpop.f32.mrf.mxu0
        %v1610 = vadd.f32 0.0, %v1609
        %v1611 = vpop.f32.mrf.mxu0
        %1612 = vmatprep.mubr.f32.mxu0 0.0
        %1613 = vmatmul.mubr.f32.gmra.mxu0 %v1521
        %v1614 = vpop.f32.mrf.mxu0
        %v1615 = vadd.f32 0.0, %v1614
        %v1616 = vpop.f32.mrf.mxu0
        %1617 = vmatprep.mubr.f32.mxu0 0.0
        %1618 = vmatmul.mubr.f32.gmra.mxu0 %v1524
        %v1619 = vpop.f32.mrf.mxu0
        %v1620 = vadd.f32 0.0, %v1619
        %v1621 = vpop.f32.mrf.mxu0
        %1622 = vmatprep.mubr.f32.mxu0 0.0
        %1623 = vmatmul.mubr.f32.gmra.mxu0 %v1527
        %v1624 = vpop.f32.mrf.mxu0
        %v1625 = vadd.f32 0.0, %v1624
        %v1626 = vpop.f32.mrf.mxu0
        %1627 = vmatprep.mubr.f32.mxu0 0.0
        %1628 = vmatmul.mubr.f32.gmra.mxu0 %v1530
        %v1629 = vpop.f32.mrf.mxu0
        %v1630 = vadd.f32 0.0, %v1629
        %v1631 = vpop.f32.mrf.mxu0
        %1632 = vmatprep.mubr.f32.mxu0 0.0
        %1633 = vmatmul.mubr.f32.gmra.mxu0 %v1533
        %v1634 = vpop.f32.mrf.mxu0
        %v1635 = vadd.f32 0.0, %v1634
        %v1636 = vpop.f32.mrf.mxu0
        %1637 = vmatprep.mubr.f32.mxu0 0.0
        %1638 = vmatmul.mubr.f32.gmra.mxu0 %v1536
        %v1639 = vpop.f32.mrf.mxu0
        %v1640 = vadd.f32 0.0, %v1639
        %v1641 = vpop.f32.mrf.mxu0
        %1642 = vdwg.mxu0
        %v1643 = vadd.f32 %v1463, %v1605
        %v1644 = vadd.f32 %v1468, %v1610
        %v1645 = vadd.f32 %v1473, %v1615
        %v1646 = vadd.f32 %v1478, %v1620
        %v1647 = vadd.f32 %v1483, %v1625
        %v1648 = vadd.f32 %v1488, %v1630
        %v1649 = vadd.f32 %v1493, %v1635
        %v1650 = vadd.f32 %v1498, %v1640
        %v1651 = vld [vmem:[%s1209] sm:$0xff]
        %v1652 = vld [vmem:[%s1209 + $0x10] sm:$0xff]
        %v1653 = vld [vmem:[%s1209 + $0x20] sm:$0xff]
        %v1654 = vld [vmem:[%s1209 + $0x30] sm:$0xff]
        %v1655 = vld [vmem:[%s1209 + $0x40] sm:$0xff]
        %v1656 = vld [vmem:[%s1209 + $0x50] sm:$0xff]
        %v1657 = vld [vmem:[%s1209 + $0x60] sm:$0xff]
        %v1658 = vld [vmem:[%s1209 + $0x70] sm:$0xff]
        %s1659 = scalar_lea.vmem %s9, 96
        %v1660 = vld [vmem:[%s1659] sm:$0xff]
        %v1661 = vld [vmem:[%s1659 + $0x8] sm:$0xff]
        %v1662 = vld [vmem:[%s1659 + $0x10] sm:$0xff]
        %v1663 = vld [vmem:[%s1659 + $0x18] sm:$0xff]
        %v1665 = vsel %vm612, %v1651, 0
        %v1668 = vsel %vm612, %v1652, 0
        %v1671 = vsel %vm612, %v1653, 0
        %v1674 = vsel %vm612, %v1654, 0
        %v1677 = vsel %vm612, %v1655, 0
        %v1680 = vsel %vm612, %v1656, 0
        %v1683 = vsel %vm612, %v1657, 0
        %v1686 = vsel %vm612, %v1658, 0
        %1688 = vmatprep.subr.mxu0 0.0
        %1689 = vmatpush1.msra.mxu0 0.0
        %1690 = vmatprep.subr.mxu0 0.0
        %1691 = vmatpush1.msra.mxu0 0.0
        %1692 = vmatprep.subr.mxu0 0.0
        %1693 = vmatpush1.msra.mxu0 0.0
        %1694 = vmatprep.subr.mxu0 0.0
        %1695 = vmatpush1.msra.mxu0 0.0
        %1696 = vmatprep.subr.mxu0 0.0
        %1697 = vmatpush1.msra.mxu0 0.0
        %1698 = vmatprep.subr.mxu0 0.0
        %1699 = vmatpush1.msra.mxu0 0.0
        %1700 = vmatprep.subr.mxu0 0.0
        %1701 = vmatpush1.msra.mxu0 0.0
        %1702 = vmatprep.subr.mxu0 0.0
        %1703 = vmatpush1.msra.mxu0 0.0
        %1704 = vmatprep.subr.mxu0 0.0
        %1705 = vmatpush1.msra.mxu0 0.0
        %1706 = vmatprep.subr.mxu0 0.0
        %1707 = vmatpush1.msra.mxu0 0.0
        %1708 = vmatprep.subr.mxu0 0.0
        %1709 = vmatpush1.msra.mxu0 0.0
        %1710 = vmatprep.subr.mxu0 0.0
        %1711 = vmatpush1.msra.mxu0 0.0
        %1712 = vmatprep.subr.mxu0 0.0
        %1713 = vmatpush1.msra.mxu0 %v1663
        %1714 = vmatprep.subr.mxu0 0.0
        %1715 = vmatpush1.msra.mxu0 %v1662
        %1716 = vmatprep.subr.mxu0 0.0
        %1717 = vmatpush1.msra.mxu0 %v1661
        %1718 = vmatprep.subr.mxu0 0.0
        %1719 = vmatpush1.msra.mxu0 %v1660
        %1720 = vmatprep.subr.mxu0 0.0
        %1721 = vmatpush2.msra.mxu0 0.0
        %1722 = vmatprep.subr.mxu0 0.0
        %1723 = vmatpush2.msra.mxu0 0.0
        %1724 = vmatprep.subr.mxu0 0.0
        %1725 = vmatpush2.msra.mxu0 0.0
        %1726 = vmatprep.subr.mxu0 0.0
        %1727 = vmatpush2.msra.mxu0 0.0
        %1728 = vmatprep.subr.mxu0 0.0
        %1729 = vmatpush2.msra.mxu0 0.0
        %1730 = vmatprep.subr.mxu0 0.0
        %1731 = vmatpush2.msra.mxu0 0.0
        %1732 = vmatprep.subr.mxu0 0.0
        %1733 = vmatpush2.msra.mxu0 0.0
        %1734 = vmatprep.subr.mxu0 0.0
        %1735 = vmatpush2.msra.mxu0 0.0
        %1736 = vmatprep.subr.mxu0 0.0
        %1737 = vmatpush2.msra.mxu0 0.0
        %1738 = vmatprep.subr.mxu0 0.0
        %1739 = vmatpush2.msra.mxu0 0.0
        %1740 = vmatprep.subr.mxu0 0.0
        %1741 = vmatpush2.msra.mxu0 0.0
        %1742 = vmatprep.subr.mxu0 0.0
        %1743 = vmatpush2.msra.mxu0 0.0
        %1744 = vmatprep.subr.mxu0 0.0
        %1745 = vmatpush2.msra.mxu0 0.0
        %1746 = vmatprep.subr.mxu0 0.0
        %1747 = vmatpush2.msra.mxu0 0.0
        %1748 = vmatprep.subr.mxu0 0.0
        %1749 = vmatpush2.msra.mxu0 0.0
        %1750 = vmatprep.subr.mxu0 0.0
        %1751 = vmatpush2.msra.mxu0 0.0
        %1752 = vmatprep.mubr.f32.mxu0 0.0
        %1753 = vmatmul.mubr.f32.gmra.mxu0 %v1665
        %v1754 = vpop.f32.mrf.mxu0
        %v1755 = vadd.f32 0.0, %v1754
        %v1756 = vpop.f32.mrf.mxu0
        %1757 = vmatprep.mubr.f32.mxu0 0.0
        %1758 = vmatmul.mubr.f32.gmra.mxu0 %v1668
        %v1759 = vpop.f32.mrf.mxu0
        %v1760 = vadd.f32 0.0, %v1759
        %v1761 = vpop.f32.mrf.mxu0
        %1762 = vmatprep.mubr.f32.mxu0 0.0
        %1763 = vmatmul.mubr.f32.gmra.mxu0 %v1671
        %v1764 = vpop.f32.mrf.mxu0
        %v1765 = vadd.f32 0.0, %v1764
        %v1766 = vpop.f32.mrf.mxu0
        %1767 = vmatprep.mubr.f32.mxu0 0.0
        %1768 = vmatmul.mubr.f32.gmra.mxu0 %v1674
        %v1769 = vpop.f32.mrf.mxu0
        %v1770 = vadd.f32 0.0, %v1769
        %v1771 = vpop.f32.mrf.mxu0
        %1772 = vmatprep.mubr.f32.mxu0 0.0
        %1773 = vmatmul.mubr.f32.gmra.mxu0 %v1677
        %v1774 = vpop.f32.mrf.mxu0
        %v1775 = vadd.f32 0.0, %v1774
        %v1776 = vpop.f32.mrf.mxu0
        %1777 = vmatprep.mubr.f32.mxu0 0.0
        %1778 = vmatmul.mubr.f32.gmra.mxu0 %v1680
        %v1779 = vpop.f32.mrf.mxu0
        %v1780 = vadd.f32 0.0, %v1779
        %v1781 = vpop.f32.mrf.mxu0
        %1782 = vmatprep.mubr.f32.mxu0 0.0
        %1783 = vmatmul.mubr.f32.gmra.mxu0 %v1683
        %v1784 = vpop.f32.mrf.mxu0
        %v1785 = vadd.f32 0.0, %v1784
        %v1786 = vpop.f32.mrf.mxu0
        %1787 = vmatprep.mubr.f32.mxu0 0.0
        %1788 = vmatmul.mubr.f32.gmra.mxu0 %v1686
        %v1789 = vpop.f32.mrf.mxu0
        %v1790 = vadd.f32 0.0, %v1789
        %v1791 = vpop.f32.mrf.mxu0
        %1792 = vdwg.mxu0
        %v1793 = vadd.f32 %v1643, %v1755
        %v1794 = vadd.f32 %v1644, %v1760
        %v1795 = vadd.f32 %v1645, %v1765
        %v1796 = vadd.f32 %v1646, %v1770
        %v1797 = vadd.f32 %v1647, %v1775
        %v1798 = vadd.f32 %v1648, %v1780
        %v1799 = vadd.f32 %v1649, %v1785
        %v1800 = vadd.f32 %v1650, %v1790
        %v1801 = vld [vmem:[%s1209 + $0x1] sm:$0xff]
        %v1802 = vld [vmem:[%s1209 + $0x11] sm:$0xff]
        %v1803 = vld [vmem:[%s1209 + $0x21] sm:$0xff]
        %v1804 = vld [vmem:[%s1209 + $0x31] sm:$0xff]
        %v1805 = vld [vmem:[%s1209 + $0x41] sm:$0xff]
        %v1806 = vld [vmem:[%s1209 + $0x51] sm:$0xff]
        %v1807 = vld [vmem:[%s1209 + $0x61] sm:$0xff]
        %v1808 = vld [vmem:[%s1209 + $0x71] sm:$0xff]
        %s1809 = scalar_lea.vmem %s9, 128
        %v1810 = vld [vmem:[%s1809] sm:$0xff]
        %v1811 = vld [vmem:[%s1809 + $0x8] sm:$0xff]
        %v1812 = vld [vmem:[%s1809 + $0x10] sm:$0xff]
        %v1813 = vld [vmem:[%s1809 + $0x18] sm:$0xff]
        %v1815 = vsel %vm612, %v1801, 0
        %v1818 = vsel %vm612, %v1802, 0
        %v1821 = vsel %vm612, %v1803, 0
        %v1824 = vsel %vm612, %v1804, 0
        %v1827 = vsel %vm612, %v1805, 0
        %v1830 = vsel %vm612, %v1806, 0
        %v1833 = vsel %vm612, %v1807, 0
        %v1836 = vsel %vm612, %v1808, 0
        %1838 = vmatprep.subr.mxu0 0.0
        %1839 = vmatpush1.msra.mxu0 0.0
        %1840 = vmatprep.subr.mxu0 0.0
        %1841 = vmatpush1.msra.mxu0 0.0
        %1842 = vmatprep.subr.mxu0 0.0
        %1843 = vmatpush1.msra.mxu0 0.0
        %1844 = vmatprep.subr.mxu0 0.0
        %1845 = vmatpush1.msra.mxu0 0.0
        %1846 = vmatprep.subr.mxu0 0.0
        %1847 = vmatpush1.msra.mxu0 0.0
        %1848 = vmatprep.subr.mxu0 0.0
        %1849 = vmatpush1.msra.mxu0 0.0
        %1850 = vmatprep.subr.mxu0 0.0
        %1851 = vmatpush1.msra.mxu0 0.0
        %1852 = vmatprep.subr.mxu0 0.0
        %1853 = vmatpush1.msra.mxu0 0.0
        %1854 = vmatprep.subr.mxu0 0.0
        %1855 = vmatpush1.msra.mxu0 0.0
        %1856 = vmatprep.subr.mxu0 0.0
        %1857 = vmatpush1.msra.mxu0 0.0
        %1858 = vmatprep.subr.mxu0 0.0
        %1859 = vmatpush1.msra.mxu0 0.0
        %1860 = vmatprep.subr.mxu0 0.0
        %1861 = vmatpush1.msra.mxu0 0.0
        %1862 = vmatprep.subr.mxu0 0.0
        %1863 = vmatpush1.msra.mxu0 %v1813
        %1864 = vmatprep.subr.mxu0 0.0
        %1865 = vmatpush1.msra.mxu0 %v1812
        %1866 = vmatprep.subr.mxu0 0.0
        %1867 = vmatpush1.msra.mxu0 %v1811
        %1868 = vmatprep.subr.mxu0 0.0
        %1869 = vmatpush1.msra.mxu0 %v1810
        %1870 = vmatprep.subr.mxu0 0.0
        %1871 = vmatpush2.msra.mxu0 0.0
        %1872 = vmatprep.subr.mxu0 0.0
        %1873 = vmatpush2.msra.mxu0 0.0
        %1874 = vmatprep.subr.mxu0 0.0
        %1875 = vmatpush2.msra.mxu0 0.0
        %1876 = vmatprep.subr.mxu0 0.0
        %1877 = vmatpush2.msra.mxu0 0.0
        %1878 = vmatprep.subr.mxu0 0.0
        %1879 = vmatpush2.msra.mxu0 0.0
        %1880 = vmatprep.subr.mxu0 0.0
        %1881 = vmatpush2.msra.mxu0 0.0
        %1882 = vmatprep.subr.mxu0 0.0
        %1883 = vmatpush2.msra.mxu0 0.0
        %1884 = vmatprep.subr.mxu0 0.0
        %1885 = vmatpush2.msra.mxu0 0.0
        %1886 = vmatprep.subr.mxu0 0.0
        %1887 = vmatpush2.msra.mxu0 0.0
        %1888 = vmatprep.subr.mxu0 0.0
        %1889 = vmatpush2.msra.mxu0 0.0
        %1890 = vmatprep.subr.mxu0 0.0
        %1891 = vmatpush2.msra.mxu0 0.0
        %1892 = vmatprep.subr.mxu0 0.0
        %1893 = vmatpush2.msra.mxu0 0.0
        %1894 = vmatprep.subr.mxu0 0.0
        %1895 = vmatpush2.msra.mxu0 0.0
        %1896 = vmatprep.subr.mxu0 0.0
        %1897 = vmatpush2.msra.mxu0 0.0
        %1898 = vmatprep.subr.mxu0 0.0
        %1899 = vmatpush2.msra.mxu0 0.0
        %1900 = vmatprep.subr.mxu0 0.0
        %1901 = vmatpush2.msra.mxu0 0.0
        %1902 = vmatprep.mubr.f32.mxu0 0.0
        %1903 = vmatmul.mubr.f32.gmra.mxu0 %v1815
        %v1904 = vpop.f32.mrf.mxu0
        %v1905 = vadd.f32 0.0, %v1904
        %v1906 = vpop.f32.mrf.mxu0
        %1907 = vmatprep.mubr.f32.mxu0 0.0
        %1908 = vmatmul.mubr.f32.gmra.mxu0 %v1818
        %v1909 = vpop.f32.mrf.mxu0
        %v1910 = vadd.f32 0.0, %v1909
        %v1911 = vpop.f32.mrf.mxu0
        %1912 = vmatprep.mubr.f32.mxu0 0.0
        %1913 = vmatmul.mubr.f32.gmra.mxu0 %v1821
        %v1914 = vpop.f32.mrf.mxu0
        %v1915 = vadd.f32 0.0, %v1914
        %v1916 = vpop.f32.mrf.mxu0
        %1917 = vmatprep.mubr.f32.mxu0 0.0
        %1918 = vmatmul.mubr.f32.gmra.mxu0 %v1824
        %v1919 = vpop.f32.mrf.mxu0
        %v1920 = vadd.f32 0.0, %v1919
        %v1921 = vpop.f32.mrf.mxu0
        %1922 = vmatprep.mubr.f32.mxu0 0.0
        %1923 = vmatmul.mubr.f32.gmra.mxu0 %v1827
        %v1924 = vpop.f32.mrf.mxu0
        %v1925 = vadd.f32 0.0, %v1924
        %v1926 = vpop.f32.mrf.mxu0
        %1927 = vmatprep.mubr.f32.mxu0 0.0
        %1928 = vmatmul.mubr.f32.gmra.mxu0 %v1830
        %v1929 = vpop.f32.mrf.mxu0
        %v1930 = vadd.f32 0.0, %v1929
        %v1931 = vpop.f32.mrf.mxu0
        %1932 = vmatprep.mubr.f32.mxu0 0.0
        %1933 = vmatmul.mubr.f32.gmra.mxu0 %v1833
        %v1934 = vpop.f32.mrf.mxu0
        %v1935 = vadd.f32 0.0, %v1934
        %v1936 = vpop.f32.mrf.mxu0
        %1937 = vmatprep.mubr.f32.mxu0 0.0
        %1938 = vmatmul.mubr.f32.gmra.mxu0 %v1836
        %v1939 = vpop.f32.mrf.mxu0
        %v1940 = vadd.f32 0.0, %v1939
        %v1941 = vpop.f32.mrf.mxu0
        %1942 = vdwg.mxu0
        %v1943 = vadd.f32 %v1793, %v1905
        %v1944 = vadd.f32 %v1794, %v1910
        %v1945 = vadd.f32 %v1795, %v1915
        %v1946 = vadd.f32 %v1796, %v1920
        %v1947 = vadd.f32 %v1797, %v1925
        %v1948 = vadd.f32 %v1798, %v1930
        %v1949 = vadd.f32 %v1799, %v1935
        %v1950 = vadd.f32 %v1800, %v1940
        %v1951 = vld [vmem:[%s1209 + $0x2] sm:$0xff]
        %v1952 = vld [vmem:[%s1209 + $0x12] sm:$0xff]
        %v1953 = vld [vmem:[%s1209 + $0x22] sm:$0xff]
        %v1954 = vld [vmem:[%s1209 + $0x32] sm:$0xff]
        %v1955 = vld [vmem:[%s1209 + $0x42] sm:$0xff]
        %v1956 = vld [vmem:[%s1209 + $0x52] sm:$0xff]
        %v1957 = vld [vmem:[%s1209 + $0x62] sm:$0xff]
        %v1958 = vld [vmem:[%s1209 + $0x72] sm:$0xff]
        %s1959 = scalar_lea.vmem %s9, 160
        %v1960 = vld [vmem:[%s1959] sm:$0xff]
        %v1961 = vld [vmem:[%s1959 + $0x8] sm:$0xff]
        %v1962 = vld [vmem:[%s1959 + $0x10] sm:$0xff]
        %v1963 = vld [vmem:[%s1959 + $0x18] sm:$0xff]
        %v1965 = vsel %vm612, %v1951, 0
        %v1968 = vsel %vm612, %v1952, 0
        %v1971 = vsel %vm612, %v1953, 0
        %v1974 = vsel %vm612, %v1954, 0
        %v1977 = vsel %vm612, %v1955, 0
        %v1980 = vsel %vm612, %v1956, 0
        %v1983 = vsel %vm612, %v1957, 0
        %v1986 = vsel %vm612, %v1958, 0
        %1988 = vmatprep.subr.mxu0 0.0
        %1989 = vmatpush1.msra.mxu0 0.0
        %1990 = vmatprep.subr.mxu0 0.0
        %1991 = vmatpush1.msra.mxu0 0.0
        %1992 = vmatprep.subr.mxu0 0.0
        %1993 = vmatpush1.msra.mxu0 0.0
        %1994 = vmatprep.subr.mxu0 0.0
        %1995 = vmatpush1.msra.mxu0 0.0
        %1996 = vmatprep.subr.mxu0 0.0
        %1997 = vmatpush1.msra.mxu0 0.0
        %1998 = vmatprep.subr.mxu0 0.0
        %1999 = vmatpush1.msra.mxu0 0.0
        %2000 = vmatprep.subr.mxu0 0.0
        %2001 = vmatpush1.msra.mxu0 0.0
        %2002 = vmatprep.subr.mxu0 0.0
        %2003 = vmatpush1.msra.mxu0 0.0
        %2004 = vmatprep.subr.mxu0 0.0
        %2005 = vmatpush1.msra.mxu0 0.0
        %2006 = vmatprep.subr.mxu0 0.0
        %2007 = vmatpush1.msra.mxu0 0.0
        %2008 = vmatprep.subr.mxu0 0.0
        %2009 = vmatpush1.msra.mxu0 0.0
        %2010 = vmatprep.subr.mxu0 0.0
        %2011 = vmatpush1.msra.mxu0 0.0
        %2012 = vmatprep.subr.mxu0 0.0
        %2013 = vmatpush1.msra.mxu0 %v1963
        %2014 = vmatprep.subr.mxu0 0.0
        %2015 = vmatpush1.msra.mxu0 %v1962
        %2016 = vmatprep.subr.mxu0 0.0
        %2017 = vmatpush1.msra.mxu0 %v1961
        %2018 = vmatprep.subr.mxu0 0.0
        %2019 = vmatpush1.msra.mxu0 %v1960
        %2020 = vmatprep.subr.mxu0 0.0
        %2021 = vmatpush2.msra.mxu0 0.0
        %2022 = vmatprep.subr.mxu0 0.0
        %2023 = vmatpush2.msra.mxu0 0.0
        %2024 = vmatprep.subr.mxu0 0.0
        %2025 = vmatpush2.msra.mxu0 0.0
        %2026 = vmatprep.subr.mxu0 0.0
        %2027 = vmatpush2.msra.mxu0 0.0
        %2028 = vmatprep.subr.mxu0 0.0
        %2029 = vmatpush2.msra.mxu0 0.0
        %2030 = vmatprep.subr.mxu0 0.0
        %2031 = vmatpush2.msra.mxu0 0.0
        %2032 = vmatprep.subr.mxu0 0.0
        %2033 = vmatpush2.msra.mxu0 0.0
        %2034 = vmatprep.subr.mxu0 0.0
        %2035 = vmatpush2.msra.mxu0 0.0
        %2036 = vmatprep.subr.mxu0 0.0
        %2037 = vmatpush2.msra.mxu0 0.0
        %2038 = vmatprep.subr.mxu0 0.0
        %2039 = vmatpush2.msra.mxu0 0.0
        %2040 = vmatprep.subr.mxu0 0.0
        %2041 = vmatpush2.msra.mxu0 0.0
        %2042 = vmatprep.subr.mxu0 0.0
        %2043 = vmatpush2.msra.mxu0 0.0
        %2044 = vmatprep.subr.mxu0 0.0
        %2045 = vmatpush2.msra.mxu0 0.0
        %2046 = vmatprep.subr.mxu0 0.0
        %2047 = vmatpush2.msra.mxu0 0.0
        %2048 = vmatprep.subr.mxu0 0.0
        %2049 = vmatpush2.msra.mxu0 0.0
        %2050 = vmatprep.subr.mxu0 0.0
        %2051 = vmatpush2.msra.mxu0 0.0
        %2052 = vmatprep.mubr.f32.mxu0 0.0
        %2053 = vmatmul.mubr.f32.gmra.mxu0 %v1965
        %v2054 = vpop.f32.mrf.mxu0
        %v2055 = vadd.f32 0.0, %v2054
        %v2056 = vpop.f32.mrf.mxu0
        %2057 = vmatprep.mubr.f32.mxu0 0.0
        %2058 = vmatmul.mubr.f32.gmra.mxu0 %v1968
        %v2059 = vpop.f32.mrf.mxu0
        %v2060 = vadd.f32 0.0, %v2059
        %v2061 = vpop.f32.mrf.mxu0
        %2062 = vmatprep.mubr.f32.mxu0 0.0
        %2063 = vmatmul.mubr.f32.gmra.mxu0 %v1971
        %v2064 = vpop.f32.mrf.mxu0
        %v2065 = vadd.f32 0.0, %v2064
        %v2066 = vpop.f32.mrf.mxu0
        %2067 = vmatprep.mubr.f32.mxu0 0.0
        %2068 = vmatmul.mubr.f32.gmra.mxu0 %v1974
        %v2069 = vpop.f32.mrf.mxu0
        %v2070 = vadd.f32 0.0, %v2069
        %v2071 = vpop.f32.mrf.mxu0
        %2072 = vmatprep.mubr.f32.mxu0 0.0
        %2073 = vmatmul.mubr.f32.gmra.mxu0 %v1977
        %v2074 = vpop.f32.mrf.mxu0
        %v2075 = vadd.f32 0.0, %v2074
        %v2076 = vpop.f32.mrf.mxu0
        %2077 = vmatprep.mubr.f32.mxu0 0.0
        %2078 = vmatmul.mubr.f32.gmra.mxu0 %v1980
        %v2079 = vpop.f32.mrf.mxu0
        %v2080 = vadd.f32 0.0, %v2079
        %v2081 = vpop.f32.mrf.mxu0
        %2082 = vmatprep.mubr.f32.mxu0 0.0
        %2083 = vmatmul.mubr.f32.gmra.mxu0 %v1983
        %v2084 = vpop.f32.mrf.mxu0
        %v2085 = vadd.f32 0.0, %v2084
        %v2086 = vpop.f32.mrf.mxu0
        %2087 = vmatprep.mubr.f32.mxu0 0.0
        %2088 = vmatmul.mubr.f32.gmra.mxu0 %v1986
        %v2089 = vpop.f32.mrf.mxu0
        %v2090 = vadd.f32 0.0, %v2089
        %v2091 = vpop.f32.mrf.mxu0
        %2092 = vdwg.mxu0
        %v2093 = vadd.f32 %v1943, %v2055
        %v2094 = vadd.f32 %v1944, %v2060
        %v2095 = vadd.f32 %v1945, %v2065
        %v2096 = vadd.f32 %v1946, %v2070
        %v2097 = vadd.f32 %v1947, %v2075
        %v2098 = vadd.f32 %v1948, %v2080
        %v2099 = vadd.f32 %v1949, %v2085
        %v2100 = vadd.f32 %v1950, %v2090
        %s2101 = scalar_lea.vmem [#allocation2], 32
        %v2102 = vld [vmem:[%s2101] sm:$0xff]
        %v2103 = vld [vmem:[%s2101 + $0x10] sm:$0xff]
        %v2104 = vld [vmem:[%s2101 + $0x20] sm:$0xff]
        %v2105 = vld [vmem:[%s2101 + $0x30] sm:$0xff]
        %v2106 = vld [vmem:[%s2101 + $0x40] sm:$0xff]
        %v2107 = vld [vmem:[%s2101 + $0x50] sm:$0xff]
        %v2108 = vld [vmem:[%s2101 + $0x60] sm:$0xff]
        %v2109 = vld [vmem:[%s2101 + $0x70] sm:$0xff]
        %s2110 = scalar_lea.vmem %s9, 192
        %v2111 = vld [vmem:[%s2110] sm:$0xff]
        %v2112 = vld [vmem:[%s2110 + $0x8] sm:$0xff]
        %v2113 = vld [vmem:[%s2110 + $0x10] sm:$0xff]
        %v2114 = vld [vmem:[%s2110 + $0x18] sm:$0xff]
        %v2116 = vsel %vm612, %v2102, 0
        %v2119 = vsel %vm612, %v2103, 0
        %v2122 = vsel %vm612, %v2104, 0
        %v2125 = vsel %vm612, %v2105, 0
        %v2128 = vsel %vm612, %v2106, 0
        %v2131 = vsel %vm612, %v2107, 0
        %v2134 = vsel %vm612, %v2108, 0
        %v2137 = vsel %vm612, %v2109, 0
        %2139 = vmatprep.subr.mxu0 0.0
        %2140 = vmatpush1.msra.mxu0 0.0
        %2141 = vmatprep.subr.mxu0 0.0
        %2142 = vmatpush1.msra.mxu0 0.0
        %2143 = vmatprep.subr.mxu0 0.0
        %2144 = vmatpush1.msra.mxu0 0.0
        %2145 = vmatprep.subr.mxu0 0.0
        %2146 = vmatpush1.msra.mxu0 0.0
        %2147 = vmatprep.subr.mxu0 0.0
        %2148 = vmatpush1.msra.mxu0 0.0
        %2149 = vmatprep.subr.mxu0 0.0
        %2150 = vmatpush1.msra.mxu0 0.0
        %2151 = vmatprep.subr.mxu0 0.0
        %2152 = vmatpush1.msra.mxu0 0.0
        %2153 = vmatprep.subr.mxu0 0.0
        %2154 = vmatpush1.msra.mxu0 0.0
        %2155 = vmatprep.subr.mxu0 0.0
        %2156 = vmatpush1.msra.mxu0 0.0
        %2157 = vmatprep.subr.mxu0 0.0
        %2158 = vmatpush1.msra.mxu0 0.0
        %2159 = vmatprep.subr.mxu0 0.0
        %2160 = vmatpush1.msra.mxu0 0.0
        %2161 = vmatprep.subr.mxu0 0.0
        %2162 = vmatpush1.msra.mxu0 0.0
        %2163 = vmatprep.subr.mxu0 0.0
        %2164 = vmatpush1.msra.mxu0 %v2114
        %2165 = vmatprep.subr.mxu0 0.0
        %2166 = vmatpush1.msra.mxu0 %v2113
        %2167 = vmatprep.subr.mxu0 0.0
        %2168 = vmatpush1.msra.mxu0 %v2112
        %2169 = vmatprep.subr.mxu0 0.0
        %2170 = vmatpush1.msra.mxu0 %v2111
        %2171 = vmatprep.subr.mxu0 0.0
        %2172 = vmatpush2.msra.mxu0 0.0
        %2173 = vmatprep.subr.mxu0 0.0
        %2174 = vmatpush2.msra.mxu0 0.0
        %2175 = vmatprep.subr.mxu0 0.0
        %2176 = vmatpush2.msra.mxu0 0.0
        %2177 = vmatprep.subr.mxu0 0.0
        %2178 = vmatpush2.msra.mxu0 0.0
        %2179 = vmatprep.subr.mxu0 0.0
        %2180 = vmatpush2.msra.mxu0 0.0
        %2181 = vmatprep.subr.mxu0 0.0
        %2182 = vmatpush2.msra.mxu0 0.0
        %2183 = vmatprep.subr.mxu0 0.0
        %2184 = vmatpush2.msra.mxu0 0.0
        %2185 = vmatprep.subr.mxu0 0.0
        %2186 = vmatpush2.msra.mxu0 0.0
        %2187 = vmatprep.subr.mxu0 0.0
        %2188 = vmatpush2.msra.mxu0 0.0
        %2189 = vmatprep.subr.mxu0 0.0
        %2190 = vmatpush2.msra.mxu0 0.0
        %2191 = vmatprep.subr.mxu0 0.0
        %2192 = vmatpush2.msra.mxu0 0.0
        %2193 = vmatprep.subr.mxu0 0.0
        %2194 = vmatpush2.msra.mxu0 0.0
        %2195 = vmatprep.subr.mxu0 0.0
        %2196 = vmatpush2.msra.mxu0 0.0
        %2197 = vmatprep.subr.mxu0 0.0
        %2198 = vmatpush2.msra.mxu0 0.0
        %2199 = vmatprep.subr.mxu0 0.0
        %2200 = vmatpush2.msra.mxu0 0.0
        %2201 = vmatprep.subr.mxu0 0.0
        %2202 = vmatpush2.msra.mxu0 0.0
        %2203 = vmatprep.mubr.f32.mxu0 0.0
        %2204 = vmatmul.mubr.f32.gmra.mxu0 %v2116
        %v2205 = vpop.f32.mrf.mxu0
        %v2206 = vadd.f32 0.0, %v2205
        %v2207 = vpop.f32.mrf.mxu0
        %2208 = vmatprep.mubr.f32.mxu0 0.0
        %2209 = vmatmul.mubr.f32.gmra.mxu0 %v2119
        %v2210 = vpop.f32.mrf.mxu0
        %v2211 = vadd.f32 0.0, %v2210
        %v2212 = vpop.f32.mrf.mxu0
        %2213 = vmatprep.mubr.f32.mxu0 0.0
        %2214 = vmatmul.mubr.f32.gmra.mxu0 %v2122
        %v2215 = vpop.f32.mrf.mxu0
        %v2216 = vadd.f32 0.0, %v2215
        %v2217 = vpop.f32.mrf.mxu0
        %2218 = vmatprep.mubr.f32.mxu0 0.0
        %2219 = vmatmul.mubr.f32.gmra.mxu0 %v2125
        %v2220 = vpop.f32.mrf.mxu0
        %v2221 = vadd.f32 0.0, %v2220
        %v2222 = vpop.f32.mrf.mxu0
        %2223 = vmatprep.mubr.f32.mxu0 0.0
        %2224 = vmatmul.mubr.f32.gmra.mxu0 %v2128
        %v2225 = vpop.f32.mrf.mxu0
        %v2226 = vadd.f32 0.0, %v2225
        %v2227 = vpop.f32.mrf.mxu0
        %2228 = vmatprep.mubr.f32.mxu0 0.0
        %2229 = vmatmul.mubr.f32.gmra.mxu0 %v2131
        %v2230 = vpop.f32.mrf.mxu0
        %v2231 = vadd.f32 0.0, %v2230
        %v2232 = vpop.f32.mrf.mxu0
        %2233 = vmatprep.mubr.f32.mxu0 0.0
        %2234 = vmatmul.mubr.f32.gmra.mxu0 %v2134
        %v2235 = vpop.f32.mrf.mxu0
        %v2236 = vadd.f32 0.0, %v2235
        %v2237 = vpop.f32.mrf.mxu0
        %2238 = vmatprep.mubr.f32.mxu0 0.0
        %2239 = vmatmul.mubr.f32.gmra.mxu0 %v2137
        %v2240 = vpop.f32.mrf.mxu0
        %v2241 = vadd.f32 0.0, %v2240
        %v2242 = vpop.f32.mrf.mxu0
        %2243 = vdwg.mxu0
        %v2244 = vadd.f32 %v2093, %v2206
        %v2245 = vadd.f32 %v2094, %v2211
        %v2246 = vadd.f32 %v2095, %v2216
        %v2247 = vadd.f32 %v2096, %v2221
        %v2248 = vadd.f32 %v2097, %v2226
        %v2249 = vadd.f32 %v2098, %v2231
        %v2250 = vadd.f32 %v2099, %v2236
        %v2251 = vadd.f32 %v2100, %v2241
        %v2252 = vld [vmem:[%s2101 + $0x1] sm:$0xff]
        %v2253 = vld [vmem:[%s2101 + $0x11] sm:$0xff]
        %v2254 = vld [vmem:[%s2101 + $0x21] sm:$0xff]
        %v2255 = vld [vmem:[%s2101 + $0x31] sm:$0xff]
        %v2256 = vld [vmem:[%s2101 + $0x41] sm:$0xff]
        %v2257 = vld [vmem:[%s2101 + $0x51] sm:$0xff]
        %v2258 = vld [vmem:[%s2101 + $0x61] sm:$0xff]
        %v2259 = vld [vmem:[%s2101 + $0x71] sm:$0xff]
        %s2260 = scalar_lea.vmem %s9, 224
        %v2261 = vld [vmem:[%s2260] sm:$0xff]
        %v2262 = vld [vmem:[%s2260 + $0x8] sm:$0xff]
        %v2263 = vld [vmem:[%s2260 + $0x10] sm:$0xff]
        %v2264 = vld [vmem:[%s2260 + $0x18] sm:$0xff]
        %v2266 = vsel %vm612, %v2252, 0
        %v2269 = vsel %vm612, %v2253, 0
        %v2272 = vsel %vm612, %v2254, 0
        %v2275 = vsel %vm612, %v2255, 0
        %v2278 = vsel %vm612, %v2256, 0
        %v2281 = vsel %vm612, %v2257, 0
        %v2284 = vsel %vm612, %v2258, 0
        %v2287 = vsel %vm612, %v2259, 0
        %2289 = vmatprep.subr.mxu0 0.0
        %2290 = vmatpush1.msra.mxu0 0.0
        %2291 = vmatprep.subr.mxu0 0.0
        %2292 = vmatpush1.msra.mxu0 0.0
        %2293 = vmatprep.subr.mxu0 0.0
        %2294 = vmatpush1.msra.mxu0 0.0
        %2295 = vmatprep.subr.mxu0 0.0
        %2296 = vmatpush1.msra.mxu0 0.0
        %2297 = vmatprep.subr.mxu0 0.0
        %2298 = vmatpush1.msra.mxu0 0.0
        %2299 = vmatprep.subr.mxu0 0.0
        %2300 = vmatpush1.msra.mxu0 0.0
        %2301 = vmatprep.subr.mxu0 0.0
        %2302 = vmatpush1.msra.mxu0 0.0
        %2303 = vmatprep.subr.mxu0 0.0
        %2304 = vmatpush1.msra.mxu0 0.0
        %2305 = vmatprep.subr.mxu0 0.0
        %2306 = vmatpush1.msra.mxu0 0.0
        %2307 = vmatprep.subr.mxu0 0.0
        %2308 = vmatpush1.msra.mxu0 0.0
        %2309 = vmatprep.subr.mxu0 0.0
        %2310 = vmatpush1.msra.mxu0 0.0
        %2311 = vmatprep.subr.mxu0 0.0
        %2312 = vmatpush1.msra.mxu0 0.0
        %2313 = vmatprep.subr.mxu0 0.0
        %2314 = vmatpush1.msra.mxu0 %v2264
        %2315 = vmatprep.subr.mxu0 0.0
        %2316 = vmatpush1.msra.mxu0 %v2263
        %2317 = vmatprep.subr.mxu0 0.0
        %2318 = vmatpush1.msra.mxu0 %v2262
        %2319 = vmatprep.subr.mxu0 0.0
        %2320 = vmatpush1.msra.mxu0 %v2261
        %2321 = vmatprep.subr.mxu0 0.0
        %2322 = vmatpush2.msra.mxu0 0.0
        %2323 = vmatprep.subr.mxu0 0.0
        %2324 = vmatpush2.msra.mxu0 0.0
        %2325 = vmatprep.subr.mxu0 0.0
        %2326 = vmatpush2.msra.mxu0 0.0
        %2327 = vmatprep.subr.mxu0 0.0
        %2328 = vmatpush2.msra.mxu0 0.0
        %2329 = vmatprep.subr.mxu0 0.0
        %2330 = vmatpush2.msra.mxu0 0.0
        %2331 = vmatprep.subr.mxu0 0.0
        %2332 = vmatpush2.msra.mxu0 0.0
        %2333 = vmatprep.subr.mxu0 0.0
        %2334 = vmatpush2.msra.mxu0 0.0
        %2335 = vmatprep.subr.mxu0 0.0
        %2336 = vmatpush2.msra.mxu0 0.0
        %2337 = vmatprep.subr.mxu0 0.0
        %2338 = vmatpush2.msra.mxu0 0.0
        %2339 = vmatprep.subr.mxu0 0.0
        %2340 = vmatpush2.msra.mxu0 0.0
        %2341 = vmatprep.subr.mxu0 0.0
        %2342 = vmatpush2.msra.mxu0 0.0
        %2343 = vmatprep.subr.mxu0 0.0
        %2344 = vmatpush2.msra.mxu0 0.0
        %2345 = vmatprep.subr.mxu0 0.0
        %2346 = vmatpush2.msra.mxu0 0.0
        %2347 = vmatprep.subr.mxu0 0.0
        %2348 = vmatpush2.msra.mxu0 0.0
        %2349 = vmatprep.subr.mxu0 0.0
        %2350 = vmatpush2.msra.mxu0 0.0
        %2351 = vmatprep.subr.mxu0 0.0
        %2352 = vmatpush2.msra.mxu0 0.0
        %2353 = vmatprep.mubr.f32.mxu0 0.0
        %2354 = vmatmul.mubr.f32.gmra.mxu0 %v2266
        %v2355 = vpop.f32.mrf.mxu0
        %v2356 = vadd.f32 0.0, %v2355
        %v2357 = vpop.f32.mrf.mxu0
        %2358 = vmatprep.mubr.f32.mxu0 0.0
        %2359 = vmatmul.mubr.f32.gmra.mxu0 %v2269
        %v2360 = vpop.f32.mrf.mxu0
        %v2361 = vadd.f32 0.0, %v2360
        %v2362 = vpop.f32.mrf.mxu0
        %2363 = vmatprep.mubr.f32.mxu0 0.0
        %2364 = vmatmul.mubr.f32.gmra.mxu0 %v2272
        %v2365 = vpop.f32.mrf.mxu0
        %v2366 = vadd.f32 0.0, %v2365
        %v2367 = vpop.f32.mrf.mxu0
        %2368 = vmatprep.mubr.f32.mxu0 0.0
        %2369 = vmatmul.mubr.f32.gmra.mxu0 %v2275
        %v2370 = vpop.f32.mrf.mxu0
        %v2371 = vadd.f32 0.0, %v2370
        %v2372 = vpop.f32.mrf.mxu0
        %2373 = vmatprep.mubr.f32.mxu0 0.0
        %2374 = vmatmul.mubr.f32.gmra.mxu0 %v2278
        %v2375 = vpop.f32.mrf.mxu0
        %v2376 = vadd.f32 0.0, %v2375
        %v2377 = vpop.f32.mrf.mxu0
        %2378 = vmatprep.mubr.f32.mxu0 0.0
        %2379 = vmatmul.mubr.f32.gmra.mxu0 %v2281
        %v2380 = vpop.f32.mrf.mxu0
        %v2381 = vadd.f32 0.0, %v2380
        %v2382 = vpop.f32.mrf.mxu0
        %2383 = vmatprep.mubr.f32.mxu0 0.0
        %2384 = vmatmul.mubr.f32.gmra.mxu0 %v2284
        %v2385 = vpop.f32.mrf.mxu0
        %v2386 = vadd.f32 0.0, %v2385
        %v2387 = vpop.f32.mrf.mxu0
        %2388 = vmatprep.mubr.f32.mxu0 0.0
        %2389 = vmatmul.mubr.f32.gmra.mxu0 %v2287
        %v2390 = vpop.f32.mrf.mxu0
        %v2391 = vadd.f32 0.0, %v2390
        %v2392 = vpop.f32.mrf.mxu0
        %2393 = vdwg.mxu0
        %v2394 = vadd.f32 %v2244, %v2356
        %v2395 = vadd.f32 %v2245, %v2361
        %v2396 = vadd.f32 %v2246, %v2366
        %v2397 = vadd.f32 %v2247, %v2371
        %v2398 = vadd.f32 %v2248, %v2376
        %v2399 = vadd.f32 %v2249, %v2381
        %v2400 = vadd.f32 %v2250, %v2386
        %v2401 = vadd.f32 %v2251, %v2391
        %v2402 = vld [vmem:[%s2101 + $0x2] sm:$0xff]
        %v2403 = vld [vmem:[%s2101 + $0x12] sm:$0xff]
        %v2404 = vld [vmem:[%s2101 + $0x22] sm:$0xff]
        %v2405 = vld [vmem:[%s2101 + $0x32] sm:$0xff]
        %v2406 = vld [vmem:[%s2101 + $0x42] sm:$0xff]
        %v2407 = vld [vmem:[%s2101 + $0x52] sm:$0xff]
        %v2408 = vld [vmem:[%s2101 + $0x62] sm:$0xff]
        %v2409 = vld [vmem:[%s2101 + $0x72] sm:$0xff]
        %s2410 = scalar_lea.vmem %s9, 256
        %v2411 = vld [vmem:[%s2410] sm:$0xff]
        %v2412 = vld [vmem:[%s2410 + $0x8] sm:$0xff]
        %v2413 = vld [vmem:[%s2410 + $0x10] sm:$0xff]
        %v2414 = vld [vmem:[%s2410 + $0x18] sm:$0xff]
        %v2416 = vsel %vm612, %v2402, 0
        %v2419 = vsel %vm612, %v2403, 0
        %v2422 = vsel %vm612, %v2404, 0
        %v2425 = vsel %vm612, %v2405, 0
        %v2428 = vsel %vm612, %v2406, 0
        %v2431 = vsel %vm612, %v2407, 0
        %v2434 = vsel %vm612, %v2408, 0
        %v2437 = vsel %vm612, %v2409, 0
        %2439 = vmatprep.subr.mxu0 0.0
        %2440 = vmatpush1.msra.mxu0 0.0
        %2441 = vmatprep.subr.mxu0 0.0
        %2442 = vmatpush1.msra.mxu0 0.0
        %2443 = vmatprep.subr.mxu0 0.0
        %2444 = vmatpush1.msra.mxu0 0.0
        %2445 = vmatprep.subr.mxu0 0.0
        %2446 = vmatpush1.msra.mxu0 0.0
        %2447 = vmatprep.subr.mxu0 0.0
        %2448 = vmatpush1.msra.mxu0 0.0
        %2449 = vmatprep.subr.mxu0 0.0
        %2450 = vmatpush1.msra.mxu0 0.0
        %2451 = vmatprep.subr.mxu0 0.0
        %2452 = vmatpush1.msra.mxu0 0.0
        %2453 = vmatprep.subr.mxu0 0.0
        %2454 = vmatpush1.msra.mxu0 0.0
        %2455 = vmatprep.subr.mxu0 0.0
        %2456 = vmatpush1.msra.mxu0 0.0
        %2457 = vmatprep.subr.mxu0 0.0
        %2458 = vmatpush1.msra.mxu0 0.0
        %2459 = vmatprep.subr.mxu0 0.0
        %2460 = vmatpush1.msra.mxu0 0.0
        %2461 = vmatprep.subr.mxu0 0.0
        %2462 = vmatpush1.msra.mxu0 0.0
        %2463 = vmatprep.subr.mxu0 0.0
        %2464 = vmatpush1.msra.mxu0 %v2414
        %2465 = vmatprep.subr.mxu0 0.0
        %2466 = vmatpush1.msra.mxu0 %v2413
        %2467 = vmatprep.subr.mxu0 0.0
        %2468 = vmatpush1.msra.mxu0 %v2412
        %2469 = vmatprep.subr.mxu0 0.0
        %2470 = vmatpush1.msra.mxu0 %v2411
        %2471 = vmatprep.subr.mxu0 0.0
        %2472 = vmatpush2.msra.mxu0 0.0
        %2473 = vmatprep.subr.mxu0 0.0
        %2474 = vmatpush2.msra.mxu0 0.0
        %2475 = vmatprep.subr.mxu0 0.0
        %2476 = vmatpush2.msra.mxu0 0.0
        %2477 = vmatprep.subr.mxu0 0.0
        %2478 = vmatpush2.msra.mxu0 0.0
        %2479 = vmatprep.subr.mxu0 0.0
        %2480 = vmatpush2.msra.mxu0 0.0
        %2481 = vmatprep.subr.mxu0 0.0
        %2482 = vmatpush2.msra.mxu0 0.0
        %2483 = vmatprep.subr.mxu0 0.0
        %2484 = vmatpush2.msra.mxu0 0.0
        %2485 = vmatprep.subr.mxu0 0.0
        %2486 = vmatpush2.msra.mxu0 0.0
        %2487 = vmatprep.subr.mxu0 0.0
        %2488 = vmatpush2.msra.mxu0 0.0
        %2489 = vmatprep.subr.mxu0 0.0
        %2490 = vmatpush2.msra.mxu0 0.0
        %2491 = vmatprep.subr.mxu0 0.0
        %2492 = vmatpush2.msra.mxu0 0.0
        %2493 = vmatprep.subr.mxu0 0.0
        %2494 = vmatpush2.msra.mxu0 0.0
        %2495 = vmatprep.subr.mxu0 0.0
        %2496 = vmatpush2.msra.mxu0 0.0
        %2497 = vmatprep.subr.mxu0 0.0
        %2498 = vmatpush2.msra.mxu0 0.0
        %2499 = vmatprep.subr.mxu0 0.0
        %2500 = vmatpush2.msra.mxu0 0.0
        %2501 = vmatprep.subr.mxu0 0.0
        %2502 = vmatpush2.msra.mxu0 0.0
        %2503 = vmatprep.mubr.f32.mxu0 0.0
        %2504 = vmatmul.mubr.f32.gmra.mxu0 %v2416
        %v2505 = vpop.f32.mrf.mxu0
        %v2506 = vadd.f32 0.0, %v2505
        %v2507 = vpop.f32.mrf.mxu0
        %2508 = vmatprep.mubr.f32.mxu0 0.0
        %2509 = vmatmul.mubr.f32.gmra.mxu0 %v2419
        %v2510 = vpop.f32.mrf.mxu0
        %v2511 = vadd.f32 0.0, %v2510
        %v2512 = vpop.f32.mrf.mxu0
        %2513 = vmatprep.mubr.f32.mxu0 0.0
        %2514 = vmatmul.mubr.f32.gmra.mxu0 %v2422
        %v2515 = vpop.f32.mrf.mxu0
        %v2516 = vadd.f32 0.0, %v2515
        %v2517 = vpop.f32.mrf.mxu0
        %2518 = vmatprep.mubr.f32.mxu0 0.0
        %2519 = vmatmul.mubr.f32.gmra.mxu0 %v2425
        %v2520 = vpop.f32.mrf.mxu0
        %v2521 = vadd.f32 0.0, %v2520
        %v2522 = vpop.f32.mrf.mxu0
        %2523 = vmatprep.mubr.f32.mxu0 0.0
        %2524 = vmatmul.mubr.f32.gmra.mxu0 %v2428
        %v2525 = vpop.f32.mrf.mxu0
        %v2526 = vadd.f32 0.0, %v2525
        %v2527 = vpop.f32.mrf.mxu0
        %2528 = vmatprep.mubr.f32.mxu0 0.0
        %2529 = vmatmul.mubr.f32.gmra.mxu0 %v2431
        %v2530 = vpop.f32.mrf.mxu0
        %v2531 = vadd.f32 0.0, %v2530
        %v2532 = vpop.f32.mrf.mxu0
        %2533 = vmatprep.mubr.f32.mxu0 0.0
        %2534 = vmatmul.mubr.f32.gmra.mxu0 %v2434
        %v2535 = vpop.f32.mrf.mxu0
        %v2536 = vadd.f32 0.0, %v2535
        %v2537 = vpop.f32.mrf.mxu0
        %2538 = vmatprep.mubr.f32.mxu0 0.0
        %2539 = vmatmul.mubr.f32.gmra.mxu0 %v2437
        %v2540 = vpop.f32.mrf.mxu0
        %v2541 = vadd.f32 0.0, %v2540
        %v2542 = vpop.f32.mrf.mxu0
        %2543 = vdwg.mxu0
        %v2544 = vadd.f32 %v2394, %v2506
        %v2545 = vadd.f32 %v2395, %v2511
        %v2546 = vadd.f32 %v2396, %v2516
        %v2547 = vadd.f32 %v2397, %v2521
        %v2548 = vadd.f32 %v2398, %v2526
        %v2549 = vadd.f32 %v2399, %v2531
        %v2550 = vadd.f32 %v2400, %v2536
        %v2551 = vadd.f32 %v2401, %v2541
        %v2552 = vld [vmem:[%s10] sm:$0x1]
        %v2554 = vlaneseq
        %v2555 = vshrl.u32 %v2554, 7
        %v2556 = vsub.s32 0, %v2555
        %v2557 = vrot.slane %v2552, %v2556
        %v2559 = vadd.f32 %v2544, %v2557
        %v2560 = vadd.f32 %v2545, %v2557
        %v2561 = vadd.f32 %v2546, %v2557
        %v2562 = vadd.f32 %v2547, %v2557
        %v2563 = vadd.f32 %v2548, %v2557
        %v2564 = vadd.f32 %v2549, %v2557
        %v2565 = vadd.f32 %v2550, %v2557
        %v2566 = vadd.f32 %v2551, %v2557
        %v2567 = vsel %vm612, %v2559, 0.0
        %v2568 = vsel %vm612, %v2560, 0.0
        %v2569 = vadd.f32 %v2567, %v2568
        %v2570 = vsel %vm612, %v2561, 0.0
        %v2571 = vadd.f32 %v2569, %v2570
        %v2572 = vsel %vm612, %v2562, 0.0
        %v2573 = vadd.f32 %v2571, %v2572
        %v2574 = vsel %vm612, %v2563, 0.0
        %v2575 = vadd.f32 %v2573, %v2574
        %v2576 = vsel %vm612, %v2564, 0.0
        %v2577 = vadd.f32 %v2575, %v2576
        %v2578 = vsel %vm612, %v2565, 0.0
        %v2579 = vadd.f32 %v2577, %v2578
        %v2580 = vsel %vm612, %v2566, 0.0
        %v2581 = vadd.f32 %v2579, %v2580
        %2582 = vadd.xlane.f32.xlu0 %v2581
        %v2583 = vpop.xlane.xlu0 %2582
        %v2584 = vrot.slane %v2583, 4
        %v2585 = vadd.f32 %v2583, %v2584
        %v2586 = vrot.slane %v2585, 2
        %v2587 = vadd.f32 %v2585, %v2586
        %v2588 = vrot.slane %v2587, 1
        %v2589 = vadd.f32 %v2587, %v2588
        %s2590 = vtos %v2589
        %v2591 = vrcp.pop 2048.0
        %s2592 = vtos %v2591
        %s2593 = smul.f32 %s2590, %s2592
        %v2594 = vstv %s2593
        %v2595 = vsub.f32 %v2559, %v2594
        %v2596 = vsub.f32 %v2560, %v2594
        %v2597 = vsub.f32 %v2561, %v2594
        %v2598 = vsub.f32 %v2562, %v2594
        %v2599 = vsub.f32 %v2563, %v2594
        %v2600 = vsub.f32 %v2564, %v2594
        %v2601 = vsub.f32 %v2565, %v2594
        %v2602 = vsub.f32 %v2566, %v2594
        %v2603 = vmul.f32 %v2595, %v2595
        %v2604 = vmul.f32 %v2596, %v2596
        %v2605 = vmul.f32 %v2597, %v2597
        %v2606 = vmul.f32 %v2598, %v2598
        %v2607 = vmul.f32 %v2599, %v2599
        %v2608 = vmul.f32 %v2600, %v2600
        %v2609 = vmul.f32 %v2601, %v2601
        %v2610 = vmul.f32 %v2602, %v2602
        %v2611 = vsel %vm612, %v2603, 0.0
        %v2612 = vsel %vm612, %v2604, 0.0
        %v2613 = vadd.f32 %v2611, %v2612
        %v2614 = vsel %vm612, %v2605, 0.0
        %v2615 = vadd.f32 %v2613, %v2614
        %v2616 = vsel %vm612, %v2606, 0.0
        %v2617 = vadd.f32 %v2615, %v2616
        %v2618 = vsel %vm612, %v2607, 0.0
        %v2619 = vadd.f32 %v2617, %v2618
        %v2620 = vsel %vm612, %v2608, 0.0
        %v2621 = vadd.f32 %v2619, %v2620
        %v2622 = vsel %vm612, %v2609, 0.0
        %v2623 = vadd.f32 %v2621, %v2622
        %v2624 = vsel %vm612, %v2610, 0.0
        %v2625 = vadd.f32 %v2623, %v2624
        %2626 = vadd.xlane.f32.xlu0 %v2625
        %v2627 = vpop.xlane.xlu0 %2626
        %v2628 = vrot.slane %v2627, 4
        %v2629 = vadd.f32 %v2627, %v2628
        %v2630 = vrot.slane %v2629, 2
        %v2631 = vadd.f32 %v2629, %v2630
        %v2632 = vrot.slane %v2631, 1
        %v2633 = vadd.f32 %v2631, %v2632
        %s2634 = vtos %v2633
        %v2635 = vrcp.pop 2048.0
        %s2636 = vtos %v2635
        %s2637 = smul.f32 %s2634, %s2636
        %s2638 = sadd.f32 %s2637, 1e-05
        %v2639 = vstv %s2638
        %v2640 = vrsqrt.pop %v2639
        %s2641 = vtos %v2640
        %v2642 = vstv %s2641
        %v2643 = vmul.f32 %v2595, %v2642
        %v2644 = vmul.f32 %v2596, %v2642
        %v2645 = vmul.f32 %v2597, %v2642
        %v2646 = vmul.f32 %v2598, %v2642
        %v2647 = vmul.f32 %v2599, %v2642
        %v2648 = vmul.f32 %v2600, %v2642
        %v2649 = vmul.f32 %v2601, %v2642
        %v2650 = vmul.f32 %v2602, %v2642
        %v2651 = vld [vmem:[%s11] sm:$0xff]
        %v2652 = vld [vmem:[%s11 + $0x8] sm:$0xff]
        %v2653 = vld [vmem:[%s11 + $0x10] sm:$0xff]
        %v2654 = vld [vmem:[%s11 + $0x18] sm:$0xff]
        %v2655 = vld [vmem:[%s11 + $0x20] sm:$0xff]
        %v2656 = vld [vmem:[%s11 + $0x28] sm:$0xff]
        %v2657 = vld [vmem:[%s11 + $0x30] sm:$0xff]
        %v2658 = vld [vmem:[%s11 + $0x38] sm:$0xff]
        %v2659 = vmul.f32 %v2643, %v2651
        %v2660 = vmul.f32 %v2644, %v2652
        %v2661 = vmul.f32 %v2645, %v2653
        %v2662 = vmul.f32 %v2646, %v2654
        %v2663 = vmul.f32 %v2647, %v2655
        %v2664 = vmul.f32 %v2648, %v2656
        %v2665 = vmul.f32 %v2649, %v2657
        %v2666 = vmul.f32 %v2650, %v2658
        %v2667 = vld [vmem:[%s12] sm:$0xff]
        %v2668 = vld [vmem:[%s12 + $0x8] sm:$0xff]
        %v2669 = vld [vmem:[%s12 + $0x10] sm:$0xff]
        %v2670 = vld [vmem:[%s12 + $0x18] sm:$0xff]
        %v2671 = vld [vmem:[%s12 + $0x20] sm:$0xff]
        %v2672 = vld [vmem:[%s12 + $0x28] sm:$0xff]
        %v2673 = vld [vmem:[%s12 + $0x30] sm:$0xff]
        %v2674 = vld [vmem:[%s12 + $0x38] sm:$0xff]
        %v2675 = vadd.f32 %v2659, %v2667
        %v2676 = vadd.f32 %v2660, %v2668
        %v2677 = vadd.f32 %v2661, %v2669
        %v2678 = vadd.f32 %v2662, %v2670
        %v2679 = vadd.f32 %v2663, %v2671
        %v2680 = vadd.f32 %v2664, %v2672
        %v2681 = vadd.f32 %v2665, %v2673
        %v2682 = vadd.f32 %v2666, %v2674
        %2683 = vst.msk [vmem:[%s579] sm:$0xff] %vm612, %v2675
        %2684 = vst.msk [vmem:[%s579 + $0x8] sm:$0xff] %vm612, %v2676
        %2685 = vst.msk [vmem:[%s579 + $0x10] sm:$0xff] %vm612, %v2677
        %2686 = vst.msk [vmem:[%s579 + $0x18] sm:$0xff] %vm612, %v2678
        %2687 = vst.msk [vmem:[%s579 + $0x20] sm:$0xff] %vm612, %v2679
        %2688 = vst.msk [vmem:[%s579 + $0x28] sm:$0xff] %vm612, %v2680
        %2689 = vst.msk [vmem:[%s579 + $0x30] sm:$0xff] %vm612, %v2681
        %2690 = vst.msk [vmem:[%s579 + $0x38] sm:$0xff] %vm612, %v2682
        %s2691 = sand.u32 %s331, 1
        %s2692 = scalar_lea.sflag [#allocation5], %s2691
        %s2693 = sand.u32 %s331, 1
        %s2694 = smul.addr %s2693, 64
        %s2695 = scalar_lea.vmem [#allocation14], %s2694
        // Predicated region
        $region97: #{encoder_forward_pallas.1} parent=71 // pred_check
          %p2696 = pneg %p341
        $region98: #{encoder_forward_pallas.1} parent=71 // pred_check_branch
          %2698 = sbr.rel (%p2696) target = $region100
        $region99: #{encoder_forward_pallas.1} parent=71 // pred_region
          %s2700 = ssub.s32 1024, 1024
          %2701 = vsyncadd %s2692, %s2700
          %s2702 = smul.addr %s35, 8
          %s2703 = smul.addr %s2702, 128
          %s2704 = scalar_lea.hbm %s13, %s2703
          %s2705 = sshll.u32 %s2695, 4
          %s2706 = int_to_ptr.vmem [resolvable:$true] %s2705
          %2711 = dma.vmem_to_hbm [thread:$0]  %s2706, 1024, %s2704, %s2692, 128, 128, 8
        $region100: #{encoder_forward_pallas.1} parent=71 // pred_fallthru
          _
      $region72: #{encoder_forward_pallas.1} parent=5 // pred_fallthru
        _
      %p2712 = scmp.le.s32.totalorder 2, %s30
      // Predicated region
      $region101: #{encoder_forward_pallas.1} parent=5 // pred_check
        %p2713 = pneg %p2712
      $region102: #{encoder_forward_pallas.1} parent=5 // pred_check_branch
        %2715 = sbr.rel (%p2713) target = $region104
      $region103: #{encoder_forward_pallas.1} parent=5 // pred_region
        %s2716 = ssub.s32 %s30, 2
        // Predicated region
        $region105: #{encoder_forward_pallas.1} parent=103 // pred_check
          %p2717 = pneg %p347
        $region106: #{encoder_forward_pallas.1} parent=103 // pred_check_branch
          %2719 = sbr.rel (%p2717) target = $region108
        $region107: #{encoder_forward_pallas.1} parent=103 // pred_region
          %s2720 = sand.u32 %s332, 1
          %s2721 = scalar_lea.sflag [#allocation5], %s2720
          %s2722 = sand.u32 %s332, 1
          %s2723 = smul.addr %s2722, 64
          %s2724 = scalar_lea.vmem [#allocation14], %s2723
          %2725 = dma.done %s2721, 1024
        $region108: #{encoder_forward_pallas.1} parent=103 // pred_fallthru
          _
      $region104: #{encoder_forward_pallas.1} parent=5 // pred_fallthru
        _
    $region6: #{encoder_forward_pallas.1} parent=1 // loop_footer
      %s34 = sadd.s32 1, %s30
    $region7: #{encoder_forward_pallas.1} parent=1 // loop_footer_branch
      %29 = sbr.rel target = $region3
    $region8: #{encoder_forward_pallas.1} parent=1 // loop_exit
      _
    %2726 = vsyncpa [#allocation4], 1
    %s2727 = scalar_lea.sflag [#allocation4], 1
    %2728 = vsyncpa %s2727, 1
    %2729 = vsyncpa [#allocation7], 1
    %s2730 = scalar_lea.sflag [#allocation7], 1
    %2731 = vsyncpa %s2730, 1
    %2732 = vsyncpa [#allocation10], 1
    %2733 = vsyncpa [#allocation13], 1
    %2734 = vsyncpa [#allocation5], 1
    %s2735 = scalar_lea.sflag [#allocation5], 1
    %2736 = vsyncpa %s2735, 1

</llo_original>
